<compile_context>
chip_gen: v7x
topology: tpu7x:2x2x1
jax: 0.10.0
libtpu: 0.0.40
codegen_flags: <defaults>
</compile_context>

<pallas_src>
import functools

import jax
import jax.numpy as jnp
from jax import lax
from jax.experimental import pallas as pl
from jax.experimental.pallas import tpu as pltpu


def _bilstm_kernel(xin_ref, wx_ref, wh_ref, b_ref,
                   out_f_ref, out_b_ref,
                   xproj_ref,
                   *, seq_len, batch, hidden):
    S, B, H = seq_len, batch, hidden

    # ---- One packed MXU matmul computes the input projections of BOTH
    # directions for ALL time steps (bias folded in).  Row block t of the
    # result holds [fwd gates of x_t | bwd gates of x_{S-1-t}] in the
    # gate-interleaved column layout [i_f i_b f_f f_b g_f g_b o_f o_b].
    xproj_ref[...] = (
        jnp.dot(xin_ref[...], wx_ref[...], preferred_element_type=jnp.float32)
        + b_ref[...])

    # Block-diagonal, gate-interleaved recurrent weights: loaded once, reused
    # by every per-step matmul.
    wh = wh_ref[...]

    # Initial hidden / cell state (PyTorch default: zeros).  Forward state in
    # columns [0, H), backward state in [H, 2H).  Kept as loop-carried values
    # (vregs), never bounced through VMEM.
    h = jnp.zeros((B, 2 * H), jnp.float32)
    c = jnp.zeros((B, 2 * H), jnp.float32)

    # ---- Sequential recurrence, fully unrolled (S is a static constant).
    # Both directions advance in the same iteration with a single MXU matmul
    # and shared elementwise gate math.
    for t in range(S):
        tb = S - 1 - t
        gates = xproj_ref[t * B:(t + 1) * B, :] + jnp.dot(
            h, wh, preferred_element_type=jnp.float32)
        # Gate layout: [i_f i_b | f_f f_b | g_f g_b | o_f o_b], each H wide.
        i = jax.nn.sigmoid(gates[:, 0 * H:2 * H])
        f = jax.nn.sigmoid(gates[:, 2 * H:4 * H])
        g = jnp.tanh(gates[:, 4 * H:6 * H])
        o = jax.nn.sigmoid(gates[:, 6 * H:8 * H])
        c = f * c + i * g
        h = o * jnp.tanh(c)
        out_f_ref[t] = h[:, :H]      # forward hidden for time t
        out_b_ref[tb] = h[:, H:]     # backward hidden for time S-1-t


def bilstm_head_pallas(x, params):
    """x: (S, B, E) float32. params in PyTorch nn.LSTM (bidirectional) layout."""
    wih_f, whh_f, bih_f, bhh_f, wih_b, whh_b, bih_b, bhh_b = params
    S, B, E = x.shape
    H = whh_f.shape[1]
    H4, H8 = 4 * H, 8 * H

    def interleave(a, b):
        # a, b: (n, 4H) in PyTorch gate order [i|f|g|o].
        # Result: (n, 8H) with columns [i_f i_b f_f f_b g_f g_b o_f o_b].
        n = a.shape[0]
        return jnp.stack(
            [a.reshape(n, 4, H), b.reshape(n, 4, H)], axis=2).reshape(n, H8)

    wx_f = jnp.asarray(wih_f).T          # (E, 4H)
    wx_b = jnp.asarray(wih_b).T          # (E, 4H)
    wh_f = jnp.asarray(whh_f).T          # (H, 4H)
    wh_b = jnp.asarray(whh_b).T          # (H, 4H)

    # (2E, 8H): rows [0, E) multiply x_t (forward gates), rows [E, 2E) multiply
    # x_{S-1-t} (backward gates).
    wx_cat = jnp.concatenate(
        [interleave(wx_f, jnp.zeros_like(wx_b)),
         interleave(jnp.zeros_like(wx_f), wx_b)], axis=0)
    # (2H, 8H) block-diagonal recurrent weights (h_f -> fwd cols, h_b -> bwd).
    wh_blk = jnp.concatenate(
        [interleave(wh_f, jnp.zeros_like(wh_b)),
         interleave(jnp.zeros_like(wh_f), wh_b)], axis=0)
    # (1, 8H) combined biases (b_ih + b_hh per direction), gate-interleaved.
    b_il = interleave((bih_f + bhh_f).reshape(1, H4),
                      (bih_b + bhh_b).reshape(1, H4))

    # Pack (seq, batch) into the matmul M dim; concatenate x with its
    # time-reversed copy on the feature axis so one matmul yields the fwd
    # projection at t and the bwd projection at S-1-t on the same rows.
    x2 = x.reshape(S * B, E)
    x2_rev = x[::-1].reshape(S * B, E)
    xin = jnp.concatenate([x2, x2_rev], axis=1)      # (S*B, 2E)

    kernel = functools.partial(_bilstm_kernel, seq_len=S, batch=B, hidden=H)

    out_f, out_b = pl.pallas_call(
        kernel,
        out_shape=(jax.ShapeDtypeStruct((S, B, H), jnp.float32),
                   jax.ShapeDtypeStruct((S, B, H), jnp.float32)),
        grid_spec=pltpu.PrefetchScalarGridSpec(
            num_scalar_prefetch=0,
            grid=(1,),
            in_specs=[
                pl.BlockSpec((S * B, 2 * E), lambda i: (0, 0)),   # x ++ rev(x)
                pl.BlockSpec((2 * E, H8), lambda i: (0, 0)),      # W_x packed
                pl.BlockSpec((2 * H, H8), lambda i: (0, 0)),      # W_h block-diag
                pl.BlockSpec((1, H8), lambda i: (0, 0)),          # biases
            ],
            out_specs=[
                pl.BlockSpec((S, B, H), lambda i: (0, 0, 0)),     # forward hiddens
                pl.BlockSpec((S, B, H), lambda i: (0, 0, 0)),     # backward hiddens
            ],
            scratch_shapes=[
                pltpu.VMEM((S * B, H8), jnp.float32),   # packed x-projections
            ],
        ),
        compiler_params=pltpu.CompilerParams(
            dimension_semantics=("arbitrary",)),
    )(xin, wx_cat, wh_blk, b_il)

    # PyTorch bidirectional LSTM output: concat(forward, backward) on last dim.
    return jnp.concatenate([out_f, out_b], axis=-1)


def bilstm_reference(x, params):
    """Pure-JAX reference replicating PyTorch nn.LSTM(bidirectional=True)."""
    wih_f, whh_f, bih_f, bhh_f, wih_b, whh_b, bih_b, bhh_b = params
    S, B, E = x.shape
    H = whh_f.shape[1]

    def run(seq, wih, whh, bih, bhh):
        def step(carry, xt):
            h, c = carry
            gates = xt @ wih.T + bih + h @ whh.T + bhh
            i, f, g, o = jnp.split(gates, 4, axis=-1)
            i = jax.nn.sigmoid(i)
            f = jax.nn.sigmoid(f)
            g = jnp.tanh(g)
            o = jax.nn.sigmoid(o)
            c = f * c + i * g
            h = o * jnp.tanh(c)
            return (h, c), h
        init = (jnp.zeros((B, H), jnp.float32), jnp.zeros((B, H), jnp.float32))
        _, hs = lax.scan(step, init, seq)
        return hs

    out_f = run(x, wih_f, whh_f, bih_f, bhh_f)
    out_b = run(x[::-1], wih_b, whh_b, bih_b, bhh_b)[::-1]
    return jnp.concatenate([out_f, out_b], axis=-1)


if __name__ == "__main__":
    S, B, E, H = 8, 2, 32, 32   # seq=8, batch=2, embedding_dim=32, hidden_dim=32

    key = jax.random.PRNGKey(0)
    ks = jax.random.split(key, 9)

    x = jax.random.normal(ks[0], (S, B, E), dtype=jnp.float32)

    scale = 0.1
    wih_f = jax.random.normal(ks[1], (4 * H, E), jnp.float32) * scale
    whh_f = jax.random.normal(ks[2], (4 * H, H), jnp.float32) * scale
    bih_f = jax.random.normal(ks[3], (4 * H,), jnp.float32) * scale
    bhh_f = jax.random.normal(ks[4], (4 * H,), jnp.float32) * scale
    wih_b = jax.random.normal(ks[5], (4 * H, E), jnp.float32) * scale
    whh_b = jax.random.normal(ks[6], (4 * H, H), jnp.float32) * scale
    bih_b = jax.random.normal(ks[7], (4 * H,), jnp.float32) * scale
    bhh_b = jax.random.normal(ks[8], (4 * H,), jnp.float32) * scale
    params = (wih_f, whh_f, bih_f, bhh_f, wih_b, whh_b, bih_b, bhh_b)

    out = bilstm_head_pallas(x, params)
    out = jax.block_until_ready(out)

    ref = bilstm_reference(x, params)
    assert out.shape == (S, B, 2 * H)
    assert jnp.allclose(out, ref, atol=1e-4, rtol=1e-4), (out, ref)

    print("KERNEL_OK")
</pallas_src>

<mosaic_0001>
module attributes {stable_mosaic.version = 11 : i64} {
  func.func @_bilstm_kernel(%arg0: i32, %arg1: memref<16x64xf32, #tpu.memory_space<vmem>>, %arg2: memref<64x256xf32, #tpu.memory_space<vmem>>, %arg3: memref<64x256xf32, #tpu.memory_space<vmem>>, %arg4: memref<1x256xf32, #tpu.memory_space<vmem>>, %arg5: memref<8x2x32xf32, #tpu.memory_space<vmem>>, %arg6: memref<8x2x32xf32, #tpu.memory_space<vmem>>, %arg7: memref<16x256xf32, #tpu.memory_space<vmem>>) attributes {dimension_semantics = [#tpu.dimension_semantics<arbitrary>], iteration_bounds = array<i64: 1>, scalar_prefetch = 0 : i64, scratch_operands = 1 : i64, tpu.core_type = #tpu.core_type<tc>, window_params = [{pipeline_mode = #tpu.pipeline_mode<synchronous>, transform_indices = @transform_0, window_bounds = array<i64: 16, 64>}, {pipeline_mode = #tpu.pipeline_mode<synchronous>, transform_indices = @transform_1, window_bounds = array<i64: 64, 256>}, {pipeline_mode = #tpu.pipeline_mode<synchronous>, transform_indices = @transform_2, window_bounds = array<i64: 64, 256>}, {pipeline_mode = #tpu.pipeline_mode<synchronous>, transform_indices = @transform_3, window_bounds = array<i64: 1, 256>}, {pipeline_mode = #tpu.pipeline_mode<synchronous>, transform_indices = @transform_4, window_bounds = array<i64: 8, 2, 32>}, {pipeline_mode = #tpu.pipeline_mode<synchronous>, transform_indices = @transform_5, window_bounds = array<i64: 8, 2, 32>}]} {
    %c0 = arith.constant 0 : index
    %c0_0 = arith.constant 0 : index
    %0 = vector.load %arg1[%c0, %c0_0] : memref<16x64xf32, #tpu.memory_space<vmem>>, vector<16x64xf32>
    %c0_1 = arith.constant 0 : index
    %c0_2 = arith.constant 0 : index
    %1 = vector.load %arg2[%c0_1, %c0_2] : memref<64x256xf32, #tpu.memory_space<vmem>>, vector<64x256xf32>
    %cst = arith.constant dense<0.000000e+00> : vector<16x256xf32>
    %2 = tpu.matmul %0, %1, %cst {dimension_numbers = #tpu.dot_dimension_numbers<[1], [0], [0], [1], [0, 0, 1, 1], [], []>} : vector<16x64xf32>, vector<64x256xf32>, vector<16x256xf32> -> vector<16x256xf32>
    %c0_3 = arith.constant 0 : index
    %c0_4 = arith.constant 0 : index
    %3 = vector.load %arg4[%c0_3, %c0_4] : memref<1x256xf32, #tpu.memory_space<vmem>>, vector<1x256xf32>
    %4 = vector.broadcast %3 : vector<1x256xf32> to vector<16x256xf32>
    %5 = arith.addf %2, %4 : vector<16x256xf32>
    %c0_5 = arith.constant 0 : index
    %c0_6 = arith.constant 0 : index
    %6 = vector.load %arg7[%c0_5, %c0_6] : memref<16x256xf32, #tpu.memory_space<vmem>>, vector<16x256xf32>
    tpu.vector_store %arg7[%c0_5, %c0_6], %5 {strides = array<i32>} : memref<16x256xf32, #tpu.memory_space<vmem>>, vector<16x256xf32>,
    %c0_7 = arith.constant 0 : index
    %c0_8 = arith.constant 0 : index
    %7 = vector.load %arg3[%c0_7, %c0_8] : memref<64x256xf32, #tpu.memory_space<vmem>>, vector<64x256xf32>
    %cst_9 = arith.constant 0.000000e+00 : f32
    %8 = vector.broadcast %cst_9 : f32 to vector<2x64xf32>
    %cst_10 = arith.constant 0.000000e+00 : f32
    %9 = vector.broadcast %cst_10 : f32 to vector<2x64xf32>
    %c0_11 = arith.constant 0 : index
    %c0_12 = arith.constant 0 : index
    %10 = vector.load %arg7[%c0_11, %c0_12] : memref<16x256xf32, #tpu.memory_space<vmem>>, vector<2x256xf32>
    %cst_13 = arith.constant dense<0.000000e+00> : vector<2x256xf32>
    %11 = tpu.matmul %8, %7, %cst_13 {dimension_numbers = #tpu.dot_dimension_numbers<[1], [0], [0], [1], [0, 0, 1, 1], [], []>} : vector<2x64xf32>, vector<64x256xf32>, vector<2x256xf32> -> vector<2x256xf32>
    %12 = arith.addf %10, %11 : vector<2x256xf32>
    %13 = vector.extract_strided_slice %12 {offsets = [0, 0], sizes = [2, 64], strides = [1, 1]} : vector<2x256xf32> to vector<2x64xf32>
    %14 = arith.negf %13 : vector<2x64xf32>
    %15 = math.exp %14 : vector<2x64xf32>
    %cst_14 = arith.constant 1.000000e+00 : f32
    %16 = vector.broadcast %cst_14 : f32 to vector<2x64xf32>
    %17 = arith.addf %16, %15 : vector<2x64xf32>
    %18 = arith.divf %16, %17 : vector<2x64xf32>
    %19 = vector.extract_strided_slice %12 {offsets = [0, 64], sizes = [2, 64], strides = [1, 1]} : vector<2x256xf32> to vector<2x64xf32>
    %20 = arith.negf %19 : vector<2x64xf32>
    %21 = math.exp %20 : vector<2x64xf32>
    %cst_15 = arith.constant 1.000000e+00 : f32
    %22 = vector.broadcast %cst_15 : f32 to vector<2x64xf32>
    %23 = arith.addf %22, %21 : vector<2x64xf32>
    %24 = arith.divf %22, %23 : vector<2x64xf32>
    %25 = vector.extract_strided_slice %12 {offsets = [0, 128], sizes = [2, 64], strides = [1, 1]} : vector<2x256xf32> to vector<2x64xf32>
    %26 = math.tanh %25 : vector<2x64xf32>
    %27 = vector.extract_strided_slice %12 {offsets = [0, 192], sizes = [2, 64], strides = [1, 1]} : vector<2x256xf32> to vector<2x64xf32>
    %28 = arith.negf %27 : vector<2x64xf32>
    %29 = math.exp %28 : vector<2x64xf32>
    %cst_16 = arith.constant 1.000000e+00 : f32
    %30 = vector.broadcast %cst_16 : f32 to vector<2x64xf32>
    %31 = arith.addf %30, %29 : vector<2x64xf32>
    %32 = arith.divf %30, %31 : vector<2x64xf32>
    %33 = arith.mulf %24, %9 : vector<2x64xf32>
    %34 = arith.mulf %18, %26 : vector<2x64xf32>
    %35 = arith.addf %33, %34 : vector<2x64xf32>
    %36 = math.tanh %35 : vector<2x64xf32>
    %37 = arith.mulf %32, %36 : vector<2x64xf32>
    %38 = vector.extract_strided_slice %37 {offsets = [0, 0], sizes = [2, 32], strides = [1, 1]} : vector<2x64xf32> to vector<2x32xf32>
    %c0_17 = arith.constant 0 : index
    %c0_18 = arith.constant 0 : index
    %c0_19 = arith.constant 0 : index
    %39 = vector.load %arg5[%c0_17, %c0_18, %c0_19] : memref<8x2x32xf32, #tpu.memory_space<vmem>>, vector<1x2x32xf32>
    %40 = vector.shape_cast %39 : vector<1x2x32xf32> to vector<2x32xf32>
    %41 = vector.shape_cast %38 : vector<2x32xf32> to vector<1x2x32xf32>
    tpu.vector_store %arg5[%c0_17, %c0_18, %c0_19], %41 {strides = array<i32>} : memref<8x2x32xf32, #tpu.memory_space<vmem>>, vector<1x2x32xf32>,
    %42 = vector.extract_strided_slice %37 {offsets = [0, 32], sizes = [2, 32], strides = [1, 1]} : vector<2x64xf32> to vector<2x32xf32>
    %c7 = arith.constant 7 : index
    %c0_20 = arith.constant 0 : index
    %c0_21 = arith.constant 0 : index
    %43 = vector.load %arg6[%c7, %c0_20, %c0_21] : memref<8x2x32xf32, #tpu.memory_space<vmem>>, vector<1x2x32xf32>
    %44 = vector.shape_cast %43 : vector<1x2x32xf32> to vector<2x32xf32>
    %45 = vector.shape_cast %42 : vector<2x32xf32> to vector<1x2x32xf32>
    tpu.vector_store %arg6[%c7, %c0_20, %c0_21], %45 {strides = array<i32>} : memref<8x2x32xf32, #tpu.memory_space<vmem>>, vector<1x2x32xf32>,
    %c2 = arith.constant 2 : index
    %c0_22 = arith.constant 0 : index
    %46 = vector.load %arg7[%c2, %c0_22] : memref<16x256xf32, #tpu.memory_space<vmem>>, vector<2x256xf32>
    %cst_23 = arith.constant dense<0.000000e+00> : vector<2x256xf32>
    %47 = tpu.matmul %37, %7, %cst_23 {dimension_numbers = #tpu.dot_dimension_numbers<[1], [0], [0], [1], [0, 0, 1, 1], [], []>} : vector<2x64xf32>, vector<64x256xf32>, vector<2x256xf32> -> vector<2x256xf32>
    %48 = arith.addf %46, %47 : vector<2x256xf32>
    %49 = vector.extract_strided_slice %48 {offsets = [0, 0], sizes = [2, 64], strides = [1, 1]} : vector<2x256xf32> to vector<2x64xf32>
    %50 = arith.negf %49 : vector<2x64xf32>
    %51 = math.exp %50 : vector<2x64xf32>
    %cst_24 = arith.constant 1.000000e+00 : f32
    %52 = vector.broadcast %cst_24 : f32 to vector<2x64xf32>
    %53 = arith.addf %52, %51 : vector<2x64xf32>
    %54 = arith.divf %52, %53 : vector<2x64xf32>
    %55 = vector.extract_strided_slice %48 {offsets = [0, 64], sizes = [2, 64], strides = [1, 1]} : vector<2x256xf32> to vector<2x64xf32>
    %56 = arith.negf %55 : vector<2x64xf32>
    %57 = math.exp %56 : vector<2x64xf32>
    %cst_25 = arith.constant 1.000000e+00 : f32
    %58 = vector.broadcast %cst_25 : f32 to vector<2x64xf32>
    %59 = arith.addf %58, %57 : vector<2x64xf32>
    %60 = arith.divf %58, %59 : vector<2x64xf32>
    %61 = vector.extract_strided_slice %48 {offsets = [0, 128], sizes = [2, 64], strides = [1, 1]} : vector<2x256xf32> to vector<2x64xf32>
    %62 = math.tanh %61 : vector<2x64xf32>
    %63 = vector.extract_strided_slice %48 {offsets = [0, 192], sizes = [2, 64], strides = [1, 1]} : vector<2x256xf32> to vector<2x64xf32>
    %64 = arith.negf %63 : vector<2x64xf32>
    %65 = math.exp %64 : vector<2x64xf32>
    %cst_26 = arith.constant 1.000000e+00 : f32
    %66 = vector.broadcast %cst_26 : f32 to vector<2x64xf32>
    %67 = arith.addf %66, %65 : vector<2x64xf32>
    %68 = arith.divf %66, %67 : vector<2x64xf32>
    %69 = arith.mulf %60, %35 : vector<2x64xf32>
    %70 = arith.mulf %54, %62 : vector<2x64xf32>
    %71 = arith.addf %69, %70 : vector<2x64xf32>
    %72 = math.tanh %71 : vector<2x64xf32>
    %73 = arith.mulf %68, %72 : vector<2x64xf32>
    %74 = vector.extract_strided_slice %73 {offsets = [0, 0], sizes = [2, 32], strides = [1, 1]} : vector<2x64xf32> to vector<2x32xf32>
    %c1 = arith.constant 1 : index
    %c0_27 = arith.constant 0 : index
    %c0_28 = arith.constant 0 : index
    %75 = vector.load %arg5[%c1, %c0_27, %c0_28] : memref<8x2x32xf32, #tpu.memory_space<vmem>>, vector<1x2x32xf32>
    %76 = vector.shape_cast %75 : vector<1x2x32xf32> to vector<2x32xf32>
    %77 = vector.shape_cast %74 : vector<2x32xf32> to vector<1x2x32xf32>
    tpu.vector_store %arg5[%c1, %c0_27, %c0_28], %77 {strides = array<i32>} : memref<8x2x32xf32, #tpu.memory_space<vmem>>, vector<1x2x32xf32>,
    %78 = vector.extract_strided_slice %73 {offsets = [0, 32], sizes = [2, 32], strides = [1, 1]} : vector<2x64xf32> to vector<2x32xf32>
    %c6 = arith.constant 6 : index
    %c0_29 = arith.constant 0 : index
    %c0_30 = arith.constant 0 : index
    %79 = vector.load %arg6[%c6, %c0_29, %c0_30] : memref<8x2x32xf32, #tpu.memory_space<vmem>>, vector<1x2x32xf32>
    %80 = vector.shape_cast %79 : vector<1x2x32xf32> to vector<2x32xf32>
    %81 = vector.shape_cast %78 : vector<2x32xf32> to vector<1x2x32xf32>
    tpu.vector_store %arg6[%c6, %c0_29, %c0_30], %81 {strides = array<i32>} : memref<8x2x32xf32, #tpu.memory_space<vmem>>, vector<1x2x32xf32>,
    %c4 = arith.constant 4 : index
    %c0_31 = arith.constant 0 : index
    %82 = vector.load %arg7[%c4, %c0_31] : memref<16x256xf32, #tpu.memory_space<vmem>>, vector<2x256xf32>
    %cst_32 = arith.constant dense<0.000000e+00> : vector<2x256xf32>
    %83 = tpu.matmul %73, %7, %cst_32 {dimension_numbers = #tpu.dot_dimension_numbers<[1], [0], [0], [1], [0, 0, 1, 1], [], []>} : vector<2x64xf32>, vector<64x256xf32>, vector<2x256xf32> -> vector<2x256xf32>
    %84 = arith.addf %82, %83 : vector<2x256xf32>
    %85 = vector.extract_strided_slice %84 {offsets = [0, 0], sizes = [2, 64], strides = [1, 1]} : vector<2x256xf32> to vector<2x64xf32>
    %86 = arith.negf %85 : vector<2x64xf32>
    %87 = math.exp %86 : vector<2x64xf32>
    %cst_33 = arith.constant 1.000000e+00 : f32
    %88 = vector.broadcast %cst_33 : f32 to vector<2x64xf32>
    %89 = arith.addf %88, %87 : vector<2x64xf32>
    %90 = arith.divf %88, %89 : vector<2x64xf32>
    %91 = vector.extract_strided_slice %84 {offsets = [0, 64], sizes = [2, 64], strides = [1, 1]} : vector<2x256xf32> to vector<2x64xf32>
    %92 = arith.negf %91 : vector<2x64xf32>
    %93 = math.exp %92 : vector<2x64xf32>
    %cst_34 = arith.constant 1.000000e+00 : f32
    %94 = vector.broadcast %cst_34 : f32 to vector<2x64xf32>
    %95 = arith.addf %94, %93 : vector<2x64xf32>
    %96 = arith.divf %94, %95 : vector<2x64xf32>
    %97 = vector.extract_strided_slice %84 {offsets = [0, 128], sizes = [2, 64], strides = [1, 1]} : vector<2x256xf32> to vector<2x64xf32>
    %98 = math.tanh %97 : vector<2x64xf32>
    %99 = vector.extract_strided_slice %84 {offsets = [0, 192], sizes = [2, 64], strides = [1, 1]} : vector<2x256xf32> to vector<2x64xf32>
    %100 = arith.negf %99 : vector<2x64xf32>
    %101 = math.exp %100 : vector<2x64xf32>
    %cst_35 = arith.constant 1.000000e+00 : f32
    %102 = vector.broadcast %cst_35 : f32 to vector<2x64xf32>
    %103 = arith.addf %102, %101 : vector<2x64xf32>
    %104 = arith.divf %102, %103 : vector<2x64xf32>
    %105 = arith.mulf %96, %71 : vector<2x64xf32>
    %106 = arith.mulf %90, %98 : vector<2x64xf32>
    %107 = arith.addf %105, %106 : vector<2x64xf32>
    %108 = math.tanh %107 : vector<2x64xf32>
    %109 = arith.mulf %104, %108 : vector<2x64xf32>
    %110 = vector.extract_strided_slice %109 {offsets = [0, 0], sizes = [2, 32], strides = [1, 1]} : vector<2x64xf32> to vector<2x32xf32>
    %c2_36 = arith.constant 2 : index
    %c0_37 = arith.constant 0 : index
    %c0_38 = arith.constant 0 : index
    %111 = vector.load %arg5[%c2_36, %c0_37, %c0_38] : memref<8x2x32xf32, #tpu.memory_space<vmem>>, vector<1x2x32xf32>
    %112 = vector.shape_cast %111 : vector<1x2x32xf32> to vector<2x32xf32>
    %113 = vector.shape_cast %110 : vector<2x32xf32> to vector<1x2x32xf32>
    tpu.vector_store %arg5[%c2_36, %c0_37, %c0_38], %113 {strides = array<i32>} : memref<8x2x32xf32, #tpu.memory_space<vmem>>, vector<1x2x32xf32>,
    %114 = vector.extract_strided_slice %109 {offsets = [0, 32], sizes = [2, 32], strides = [1, 1]} : vector<2x64xf32> to vector<2x32xf32>
    %c5 = arith.constant 5 : index
    %c0_39 = arith.constant 0 : index
    %c0_40 = arith.constant 0 : index
    %115 = vector.load %arg6[%c5, %c0_39, %c0_40] : memref<8x2x32xf32, #tpu.memory_space<vmem>>, vector<1x2x32xf32>
    %116 = vector.shape_cast %115 : vector<1x2x32xf32> to vector<2x32xf32>
    %117 = vector.shape_cast %114 : vector<2x32xf32> to vector<1x2x32xf32>
    tpu.vector_store %arg6[%c5, %c0_39, %c0_40], %117 {strides = array<i32>} : memref<8x2x32xf32, #tpu.memory_space<vmem>>, vector<1x2x32xf32>,
    %c6_41 = arith.constant 6 : index
    %c0_42 = arith.constant 0 : index
    %118 = vector.load %arg7[%c6_41, %c0_42] : memref<16x256xf32, #tpu.memory_space<vmem>>, vector<2x256xf32>
    %cst_43 = arith.constant dense<0.000000e+00> : vector<2x256xf32>
    %119 = tpu.matmul %109, %7, %cst_43 {dimension_numbers = #tpu.dot_dimension_numbers<[1], [0], [0], [1], [0, 0, 1, 1], [], []>} : vector<2x64xf32>, vector<64x256xf32>, vector<2x256xf32> -> vector<2x256xf32>
    %120 = arith.addf %118, %119 : vector<2x256xf32>
    %121 = vector.extract_strided_slice %120 {offsets = [0, 0], sizes = [2, 64], strides = [1, 1]} : vector<2x256xf32> to vector<2x64xf32>
    %122 = arith.negf %121 : vector<2x64xf32>
    %123 = math.exp %122 : vector<2x64xf32>
    %cst_44 = arith.constant 1.000000e+00 : f32
    %124 = vector.broadcast %cst_44 : f32 to vector<2x64xf32>
    %125 = arith.addf %124, %123 : vector<2x64xf32>
    %126 = arith.divf %124, %125 : vector<2x64xf32>
    %127 = vector.extract_strided_slice %120 {offsets = [0, 64], sizes = [2, 64], strides = [1, 1]} : vector<2x256xf32> to vector<2x64xf32>
    %128 = arith.negf %127 : vector<2x64xf32>
    %129 = math.exp %128 : vector<2x64xf32>
    %cst_45 = arith.constant 1.000000e+00 : f32
    %130 = vector.broadcast %cst_45 : f32 to vector<2x64xf32>
    %131 = arith.addf %130, %129 : vector<2x64xf32>
    %132 = arith.divf %130, %131 : vector<2x64xf32>
    %133 = vector.extract_strided_slice %120 {offsets = [0, 128], sizes = [2, 64], strides = [1, 1]} : vector<2x256xf32> to vector<2x64xf32>
    %134 = math.tanh %133 : vector<2x64xf32>
    %135 = vector.extract_strided_slice %120 {offsets = [0, 192], sizes = [2, 64], strides = [1, 1]} : vector<2x256xf32> to vector<2x64xf32>
    %136 = arith.negf %135 : vector<2x64xf32>
    %137 = math.exp %136 : vector<2x64xf32>
    %cst_46 = arith.constant 1.000000e+00 : f32
    %138 = vector.broadcast %cst_46 : f32 to vector<2x64xf32>
    %139 = arith.addf %138, %137 : vector<2x64xf32>
    %140 = arith.divf %138, %139 : vector<2x64xf32>
    %141 = arith.mulf %132, %107 : vector<2x64xf32>
    %142 = arith.mulf %126, %134 : vector<2x64xf32>
    %143 = arith.addf %141, %142 : vector<2x64xf32>
    %144 = math.tanh %143 : vector<2x64xf32>
    %145 = arith.mulf %140, %144 : vector<2x64xf32>
    %146 = vector.extract_strided_slice %145 {offsets = [0, 0], sizes = [2, 32], strides = [1, 1]} : vector<2x64xf32> to vector<2x32xf32>
    %c3 = arith.constant 3 : index
    %c0_47 = arith.constant 0 : index
    %c0_48 = arith.constant 0 : index
    %147 = vector.load %arg5[%c3, %c0_47, %c0_48] : memref<8x2x32xf32, #tpu.memory_space<vmem>>, vector<1x2x32xf32>
    %148 = vector.shape_cast %147 : vector<1x2x32xf32> to vector<2x32xf32>
    %149 = vector.shape_cast %146 : vector<2x32xf32> to vector<1x2x32xf32>
    tpu.vector_store %arg5[%c3, %c0_47, %c0_48], %149 {strides = array<i32>} : memref<8x2x32xf32, #tpu.memory_space<vmem>>, vector<1x2x32xf32>,
    %150 = vector.extract_strided_slice %145 {offsets = [0, 32], sizes = [2, 32], strides = [1, 1]} : vector<2x64xf32> to vector<2x32xf32>
    %c4_49 = arith.constant 4 : index
    %c0_50 = arith.constant 0 : index
    %c0_51 = arith.constant 0 : index
    %151 = vector.load %arg6[%c4_49, %c0_50, %c0_51] : memref<8x2x32xf32, #tpu.memory_space<vmem>>, vector<1x2x32xf32>
    %152 = vector.shape_cast %151 : vector<1x2x32xf32> to vector<2x32xf32>
    %153 = vector.shape_cast %150 : vector<2x32xf32> to vector<1x2x32xf32>
    tpu.vector_store %arg6[%c4_49, %c0_50, %c0_51], %153 {strides = array<i32>} : memref<8x2x32xf32, #tpu.memory_space<vmem>>, vector<1x2x32xf32>,
    %c8 = arith.constant 8 : index
    %c0_52 = arith.constant 0 : index
    %154 = vector.load %arg7[%c8, %c0_52] : memref<16x256xf32, #tpu.memory_space<vmem>>, vector<2x256xf32>
    %cst_53 = arith.constant dense<0.000000e+00> : vector<2x256xf32>
    %155 = tpu.matmul %145, %7, %cst_53 {dimension_numbers = #tpu.dot_dimension_numbers<[1], [0], [0], [1], [0, 0, 1, 1], [], []>} : vector<2x64xf32>, vector<64x256xf32>, vector<2x256xf32> -> vector<2x256xf32>
    %156 = arith.addf %154, %155 : vector<2x256xf32>
    %157 = vector.extract_strided_slice %156 {offsets = [0, 0], sizes = [2, 64], strides = [1, 1]} : vector<2x256xf32> to vector<2x64xf32>
    %158 = arith.negf %157 : vector<2x64xf32>
    %159 = math.exp %158 : vector<2x64xf32>
    %cst_54 = arith.constant 1.000000e+00 : f32
    %160 = vector.broadcast %cst_54 : f32 to vector<2x64xf32>
    %161 = arith.addf %160, %159 : vector<2x64xf32>
    %162 = arith.divf %160, %161 : vector<2x64xf32>
    %163 = vector.extract_strided_slice %156 {offsets = [0, 64], sizes = [2, 64], strides = [1, 1]} : vector<2x256xf32> to vector<2x64xf32>
    %164 = arith.negf %163 : vector<2x64xf32>
    %165 = math.exp %164 : vector<2x64xf32>
    %cst_55 = arith.constant 1.000000e+00 : f32
    %166 = vector.broadcast %cst_55 : f32 to vector<2x64xf32>
    %167 = arith.addf %166, %165 : vector<2x64xf32>
    %168 = arith.divf %166, %167 : vector<2x64xf32>
    %169 = vector.extract_strided_slice %156 {offsets = [0, 128], sizes = [2, 64], strides = [1, 1]} : vector<2x256xf32> to vector<2x64xf32>
    %170 = math.tanh %169 : vector<2x64xf32>
    %171 = vector.extract_strided_slice %156 {offsets = [0, 192], sizes = [2, 64], strides = [1, 1]} : vector<2x256xf32> to vector<2x64xf32>
    %172 = arith.negf %171 : vector<2x64xf32>
    %173 = math.exp %172 : vector<2x64xf32>
    %cst_56 = arith.constant 1.000000e+00 : f32
    %174 = vector.broadcast %cst_56 : f32 to vector<2x64xf32>
    %175 = arith.addf %174, %173 : vector<2x64xf32>
    %176 = arith.divf %174, %175 : vector<2x64xf32>
    %177 = arith.mulf %168, %143 : vector<2x64xf32>
    %178 = arith.mulf %162, %170 : vector<2x64xf32>
    %179 = arith.addf %177, %178 : vector<2x64xf32>
    %180 = math.tanh %179 : vector<2x64xf32>
    %181 = arith.mulf %176, %180 : vector<2x64xf32>
    %182 = vector.extract_strided_slice %181 {offsets = [0, 0], sizes = [2, 32], strides = [1, 1]} : vector<2x64xf32> to vector<2x32xf32>
    %c4_57 = arith.constant 4 : index
    %c0_58 = arith.constant 0 : index
    %c0_59 = arith.constant 0 : index
    %183 = vector.load %arg5[%c4_57, %c0_58, %c0_59] : memref<8x2x32xf32, #tpu.memory_space<vmem>>, vector<1x2x32xf32>
    %184 = vector.shape_cast %183 : vector<1x2x32xf32> to vector<2x32xf32>
    %185 = vector.shape_cast %182 : vector<2x32xf32> to vector<1x2x32xf32>
    tpu.vector_store %arg5[%c4_57, %c0_58, %c0_59], %185 {strides = array<i32>} : memref<8x2x32xf32, #tpu.memory_space<vmem>>, vector<1x2x32xf32>,
    %186 = vector.extract_strided_slice %181 {offsets = [0, 32], sizes = [2, 32], strides = [1, 1]} : vector<2x64xf32> to vector<2x32xf32>
    %c3_60 = arith.constant 3 : index
    %c0_61 = arith.constant 0 : index
    %c0_62 = arith.constant 0 : index
    %187 = vector.load %arg6[%c3_60, %c0_61, %c0_62] : memref<8x2x32xf32, #tpu.memory_space<vmem>>, vector<1x2x32xf32>
    %188 = vector.shape_cast %187 : vector<1x2x32xf32> to vector<2x32xf32>
    %189 = vector.shape_cast %186 : vector<2x32xf32> to vector<1x2x32xf32>
    tpu.vector_store %arg6[%c3_60, %c0_61, %c0_62], %189 {strides = array<i32>} : memref<8x2x32xf32, #tpu.memory_space<vmem>>, vector<1x2x32xf32>,
    %c10 = arith.constant 10 : index
    %c0_63 = arith.constant 0 : index
    %190 = vector.load %arg7[%c10, %c0_63] : memref<16x256xf32, #tpu.memory_space<vmem>>, vector<2x256xf32>
    %cst_64 = arith.constant dense<0.000000e+00> : vector<2x256xf32>
    %191 = tpu.matmul %181, %7, %cst_64 {dimension_numbers = #tpu.dot_dimension_numbers<[1], [0], [0], [1], [0, 0, 1, 1], [], []>} : vector<2x64xf32>, vector<64x256xf32>, vector<2x256xf32> -> vector<2x256xf32>
    %192 = arith.addf %190, %191 : vector<2x256xf32>
    %193 = vector.extract_strided_slice %192 {offsets = [0, 0], sizes = [2, 64], strides = [1, 1]} : vector<2x256xf32> to vector<2x64xf32>
    %194 = arith.negf %193 : vector<2x64xf32>
    %195 = math.exp %194 : vector<2x64xf32>
    %cst_65 = arith.constant 1.000000e+00 : f32
    %196 = vector.broadcast %cst_65 : f32 to vector<2x64xf32>
    %197 = arith.addf %196, %195 : vector<2x64xf32>
    %198 = arith.divf %196, %197 : vector<2x64xf32>
    %199 = vector.extract_strided_slice %192 {offsets = [0, 64], sizes = [2, 64], strides = [1, 1]} : vector<2x256xf32> to vector<2x64xf32>
    %200 = arith.negf %199 : vector<2x64xf32>
    %201 = math.exp %200 : vector<2x64xf32>
    %cst_66 = arith.constant 1.000000e+00 : f32
    %202 = vector.broadcast %cst_66 : f32 to vector<2x64xf32>
    %203 = arith.addf %202, %201 : vector<2x64xf32>
    %204 = arith.divf %202, %203 : vector<2x64xf32>
    %205 = vector.extract_strided_slice %192 {offsets = [0, 128], sizes = [2, 64], strides = [1, 1]} : vector<2x256xf32> to vector<2x64xf32>
    %206 = math.tanh %205 : vector<2x64xf32>
    %207 = vector.extract_strided_slice %192 {offsets = [0, 192], sizes = [2, 64], strides = [1, 1]} : vector<2x256xf32> to vector<2x64xf32>
    %208 = arith.negf %207 : vector<2x64xf32>
    %209 = math.exp %208 : vector<2x64xf32>
    %cst_67 = arith.constant 1.000000e+00 : f32
    %210 = vector.broadcast %cst_67 : f32 to vector<2x64xf32>
    %211 = arith.addf %210, %209 : vector<2x64xf32>
    %212 = arith.divf %210, %211 : vector<2x64xf32>
    %213 = arith.mulf %204, %179 : vector<2x64xf32>
    %214 = arith.mulf %198, %206 : vector<2x64xf32>
    %215 = arith.addf %213, %214 : vector<2x64xf32>
    %216 = math.tanh %215 : vector<2x64xf32>
    %217 = arith.mulf %212, %216 : vector<2x64xf32>
    %218 = vector.extract_strided_slice %217 {offsets = [0, 0], sizes = [2, 32], strides = [1, 1]} : vector<2x64xf32> to vector<2x32xf32>
    %c5_68 = arith.constant 5 : index
    %c0_69 = arith.constant 0 : index
    %c0_70 = arith.constant 0 : index
    %219 = vector.load %arg5[%c5_68, %c0_69, %c0_70] : memref<8x2x32xf32, #tpu.memory_space<vmem>>, vector<1x2x32xf32>
    %220 = vector.shape_cast %219 : vector<1x2x32xf32> to vector<2x32xf32>
    %221 = vector.shape_cast %218 : vector<2x32xf32> to vector<1x2x32xf32>
    tpu.vector_store %arg5[%c5_68, %c0_69, %c0_70], %221 {strides = array<i32>} : memref<8x2x32xf32, #tpu.memory_space<vmem>>, vector<1x2x32xf32>,
    %222 = vector.extract_strided_slice %217 {offsets = [0, 32], sizes = [2, 32], strides = [1, 1]} : vector<2x64xf32> to vector<2x32xf32>
    %c2_71 = arith.constant 2 : index
    %c0_72 = arith.constant 0 : index
    %c0_73 = arith.constant 0 : index
    %223 = vector.load %arg6[%c2_71, %c0_72, %c0_73] : memref<8x2x32xf32, #tpu.memory_space<vmem>>, vector<1x2x32xf32>
    %224 = vector.shape_cast %223 : vector<1x2x32xf32> to vector<2x32xf32>
    %225 = vector.shape_cast %222 : vector<2x32xf32> to vector<1x2x32xf32>
    tpu.vector_store %arg6[%c2_71, %c0_72, %c0_73], %225 {strides = array<i32>} : memref<8x2x32xf32, #tpu.memory_space<vmem>>, vector<1x2x32xf32>,
    %c12 = arith.constant 12 : index
    %c0_74 = arith.constant 0 : index
    %226 = vector.load %arg7[%c12, %c0_74] : memref<16x256xf32, #tpu.memory_space<vmem>>, vector<2x256xf32>
    %cst_75 = arith.constant dense<0.000000e+00> : vector<2x256xf32>
    %227 = tpu.matmul %217, %7, %cst_75 {dimension_numbers = #tpu.dot_dimension_numbers<[1], [0], [0], [1], [0, 0, 1, 1], [], []>} : vector<2x64xf32>, vector<64x256xf32>, vector<2x256xf32> -> vector<2x256xf32>
    %228 = arith.addf %226, %227 : vector<2x256xf32>
    %229 = vector.extract_strided_slice %228 {offsets = [0, 0], sizes = [2, 64], strides = [1, 1]} : vector<2x256xf32> to vector<2x64xf32>
    %230 = arith.negf %229 : vector<2x64xf32>
    %231 = math.exp %230 : vector<2x64xf32>
    %cst_76 = arith.constant 1.000000e+00 : f32
    %232 = vector.broadcast %cst_76 : f32 to vector<2x64xf32>
    %233 = arith.addf %232, %231 : vector<2x64xf32>
    %234 = arith.divf %232, %233 : vector<2x64xf32>
    %235 = vector.extract_strided_slice %228 {offsets = [0, 64], sizes = [2, 64], strides = [1, 1]} : vector<2x256xf32> to vector<2x64xf32>
    %236 = arith.negf %235 : vector<2x64xf32>
    %237 = math.exp %236 : vector<2x64xf32>
    %cst_77 = arith.constant 1.000000e+00 : f32
    %238 = vector.broadcast %cst_77 : f32 to vector<2x64xf32>
    %239 = arith.addf %238, %237 : vector<2x64xf32>
    %240 = arith.divf %238, %239 : vector<2x64xf32>
    %241 = vector.extract_strided_slice %228 {offsets = [0, 128], sizes = [2, 64], strides = [1, 1]} : vector<2x256xf32> to vector<2x64xf32>
    %242 = math.tanh %241 : vector<2x64xf32>
    %243 = vector.extract_strided_slice %228 {offsets = [0, 192], sizes = [2, 64], strides = [1, 1]} : vector<2x256xf32> to vector<2x64xf32>
    %244 = arith.negf %243 : vector<2x64xf32>
    %245 = math.exp %244 : vector<2x64xf32>
    %cst_78 = arith.constant 1.000000e+00 : f32
    %246 = vector.broadcast %cst_78 : f32 to vector<2x64xf32>
    %247 = arith.addf %246, %245 : vector<2x64xf32>
    %248 = arith.divf %246, %247 : vector<2x64xf32>
    %249 = arith.mulf %240, %215 : vector<2x64xf32>
    %250 = arith.mulf %234, %242 : vector<2x64xf32>
    %251 = arith.addf %249, %250 : vector<2x64xf32>
    %252 = math.tanh %251 : vector<2x64xf32>
    %253 = arith.mulf %248, %252 : vector<2x64xf32>
    %254 = vector.extract_strided_slice %253 {offsets = [0, 0], sizes = [2, 32], strides = [1, 1]} : vector<2x64xf32> to vector<2x32xf32>
    %c6_79 = arith.constant 6 : index
    %c0_80 = arith.constant 0 : index
    %c0_81 = arith.constant 0 : index
    %255 = vector.load %arg5[%c6_79, %c0_80, %c0_81] : memref<8x2x32xf32, #tpu.memory_space<vmem>>, vector<1x2x32xf32>
    %256 = vector.shape_cast %255 : vector<1x2x32xf32> to vector<2x32xf32>
    %257 = vector.shape_cast %254 : vector<2x32xf32> to vector<1x2x32xf32>
    tpu.vector_store %arg5[%c6_79, %c0_80, %c0_81], %257 {strides = array<i32>} : memref<8x2x32xf32, #tpu.memory_space<vmem>>, vector<1x2x32xf32>,
    %258 = vector.extract_strided_slice %253 {offsets = [0, 32], sizes = [2, 32], strides = [1, 1]} : vector<2x64xf32> to vector<2x32xf32>
    %c1_82 = arith.constant 1 : index
    %c0_83 = arith.constant 0 : index
    %c0_84 = arith.constant 0 : index
    %259 = vector.load %arg6[%c1_82, %c0_83, %c0_84] : memref<8x2x32xf32, #tpu.memory_space<vmem>>, vector<1x2x32xf32>
    %260 = vector.shape_cast %259 : vector<1x2x32xf32> to vector<2x32xf32>
    %261 = vector.shape_cast %258 : vector<2x32xf32> to vector<1x2x32xf32>
    tpu.vector_store %arg6[%c1_82, %c0_83, %c0_84], %261 {strides = array<i32>} : memref<8x2x32xf32, #tpu.memory_space<vmem>>, vector<1x2x32xf32>,
    %c14 = arith.constant 14 : index
    %c0_85 = arith.constant 0 : index
    %262 = vector.load %arg7[%c14, %c0_85] : memref<16x256xf32, #tpu.memory_space<vmem>>, vector<2x256xf32>
    %cst_86 = arith.constant dense<0.000000e+00> : vector<2x256xf32>
    %263 = tpu.matmul %253, %7, %cst_86 {dimension_numbers = #tpu.dot_dimension_numbers<[1], [0], [0], [1], [0, 0, 1, 1], [], []>} : vector<2x64xf32>, vector<64x256xf32>, vector<2x256xf32> -> vector<2x256xf32>
    %264 = arith.addf %262, %263 : vector<2x256xf32>
    %265 = vector.extract_strided_slice %264 {offsets = [0, 0], sizes = [2, 64], strides = [1, 1]} : vector<2x256xf32> to vector<2x64xf32>
    %266 = arith.negf %265 : vector<2x64xf32>
    %267 = math.exp %266 : vector<2x64xf32>
    %cst_87 = arith.constant 1.000000e+00 : f32
    %268 = vector.broadcast %cst_87 : f32 to vector<2x64xf32>
    %269 = arith.addf %268, %267 : vector<2x64xf32>
    %270 = arith.divf %268, %269 : vector<2x64xf32>
    %271 = vector.extract_strided_slice %264 {offsets = [0, 64], sizes = [2, 64], strides = [1, 1]} : vector<2x256xf32> to vector<2x64xf32>
    %272 = arith.negf %271 : vector<2x64xf32>
    %273 = math.exp %272 : vector<2x64xf32>
    %cst_88 = arith.constant 1.000000e+00 : f32
    %274 = vector.broadcast %cst_88 : f32 to vector<2x64xf32>
    %275 = arith.addf %274, %273 : vector<2x64xf32>
    %276 = arith.divf %274, %275 : vector<2x64xf32>
    %277 = vector.extract_strided_slice %264 {offsets = [0, 128], sizes = [2, 64], strides = [1, 1]} : vector<2x256xf32> to vector<2x64xf32>
    %278 = math.tanh %277 : vector<2x64xf32>
    %279 = vector.extract_strided_slice %264 {offsets = [0, 192], sizes = [2, 64], strides = [1, 1]} : vector<2x256xf32> to vector<2x64xf32>
    %280 = arith.negf %279 : vector<2x64xf32>
    %281 = math.exp %280 : vector<2x64xf32>
    %cst_89 = arith.constant 1.000000e+00 : f32
    %282 = vector.broadcast %cst_89 : f32 to vector<2x64xf32>
    %283 = arith.addf %282, %281 : vector<2x64xf32>
    %284 = arith.divf %282, %283 : vector<2x64xf32>
    %285 = arith.mulf %276, %251 : vector<2x64xf32>
    %286 = arith.mulf %270, %278 : vector<2x64xf32>
    %287 = arith.addf %285, %286 : vector<2x64xf32>
    %288 = math.tanh %287 : vector<2x64xf32>
    %289 = arith.mulf %284, %288 : vector<2x64xf32>
    %290 = vector.extract_strided_slice %289 {offsets = [0, 0], sizes = [2, 32], strides = [1, 1]} : vector<2x64xf32> to vector<2x32xf32>
    %c7_90 = arith.constant 7 : index
    %c0_91 = arith.constant 0 : index
    %c0_92 = arith.constant 0 : index
    %291 = vector.load %arg5[%c7_90, %c0_91, %c0_92] : memref<8x2x32xf32, #tpu.memory_space<vmem>>, vector<1x2x32xf32>
    %292 = vector.shape_cast %291 : vector<1x2x32xf32> to vector<2x32xf32>
    %293 = vector.shape_cast %290 : vector<2x32xf32> to vector<1x2x32xf32>
    tpu.vector_store %arg5[%c7_90, %c0_91, %c0_92], %293 {strides = array<i32>} : memref<8x2x32xf32, #tpu.memory_space<vmem>>, vector<1x2x32xf32>,
    %294 = vector.extract_strided_slice %289 {offsets = [0, 32], sizes = [2, 32], strides = [1, 1]} : vector<2x64xf32> to vector<2x32xf32>
    %c0_93 = arith.constant 0 : index
    %c0_94 = arith.constant 0 : index
    %c0_95 = arith.constant 0 : index
    %295 = vector.load %arg6[%c0_93, %c0_94, %c0_95] : memref<8x2x32xf32, #tpu.memory_space<vmem>>, vector<1x2x32xf32>
    %296 = vector.shape_cast %295 : vector<1x2x32xf32> to vector<2x32xf32>
    %297 = vector.shape_cast %294 : vector<2x32xf32> to vector<1x2x32xf32>
    tpu.vector_store %arg6[%c0_93, %c0_94, %c0_95], %297 {strides = array<i32>} : memref<8x2x32xf32, #tpu.memory_space<vmem>>, vector<1x2x32xf32>,
    return
  }
  func.func @transform_0(%arg0: i32) -> (i32, i32) {
    %c0_i32 = arith.constant 0 : i32
    %c0_i32_0 = arith.constant 0 : i32
    %c0_i32_1 = arith.constant 0 : i32
    return %c0_i32, %c0_i32_0 : i32, i32
  }
  func.func @transform_1(%arg0: i32) -> (i32, i32) {
    %c0_i32 = arith.constant 0 : i32
    %c0_i32_0 = arith.constant 0 : i32
    %c0_i32_1 = arith.constant 0 : i32
    return %c0_i32, %c0_i32_0 : i32, i32
  }
  func.func @transform_2(%arg0: i32) -> (i32, i32) {
    %c0_i32 = arith.constant 0 : i32
    %c0_i32_0 = arith.constant 0 : i32
    %c0_i32_1 = arith.constant 0 : i32
    return %c0_i32, %c0_i32_0 : i32, i32
  }
  func.func @transform_3(%arg0: i32) -> (i32, i32) {
    %c0_i32 = arith.constant 0 : i32
    %c0_i32_0 = arith.constant 0 : i32
    %c0_i32_1 = arith.constant 0 : i32
    return %c0_i32, %c0_i32_0 : i32, i32
  }
  func.func @transform_4(%arg0: i32) -> (i32, i32, i32) {
    %c0_i32 = arith.constant 0 : i32
    %c0_i32_0 = arith.constant 0 : i32
    %c0_i32_1 = arith.constant 0 : i32
    %c0_i32_2 = arith.constant 0 : i32
    return %c0_i32, %c0_i32_0, %c0_i32_1 : i32, i32, i32
  }
  func.func @transform_5(%arg0: i32) -> (i32, i32, i32) {
    %c0_i32 = arith.constant 0 : i32
    %c0_i32_0 = arith.constant 0 : i32
    %c0_i32_1 = arith.constant 0 : i32
    %c0_i32_2 = arith.constant 0 : i32
    return %c0_i32, %c0_i32_0, %c0_i32_1 : i32, i32, i32
  }
}

</mosaic_0001>

<llo_original>
// kernel: tpu_custom_call.1
$region0: #{tpu_custom_call.1}
  #allocation0 [shape = 'u32[]', space=smem, size = 0x4, offset = 0x4, fixed_abs, tag = 'smem constant byte address 0x4 - core index']
  #allocation1 [shape = 'u32[144,128]{1,0:T(1,128)}', space=vmem, size = 0x12000, scoped, tag = 'internal scratch']
  #allocation2 [shape = 'f32[16,256]{1,0:T(8,128)}', space=vmem, size = 0x4000, scoped, tag = 'scratch operand']
  %s0 = inlined_call_operand.hbm [shape: f32[16,64], index: 0, kind: input, shape index: {}]
  %s1 = inlined_call_operand.hbm [shape: f32[64,256], index: 1, kind: input, shape index: {}]
  %s2 = inlined_call_operand.hbm [shape: f32[64,256], index: 2, kind: input, shape index: {}]
  %s3 = inlined_call_operand.vmem [shape: f32[1,256], index: 3, kind: input, shape index: {}]
  %s4 = inlined_call_operand.hbm [shape: f32[8,2,32], index: 4, kind: output, shape index: {0}]
  %s5 = inlined_call_operand.hbm [shape: f32[8,2,32], index: 5, kind: output, shape index: {1}]
  %6 = xla_tuple %s4, %s5
  %s7 = sld [smem:[#allocation0]]
  $region46: #{tpu_custom_call.1} parent=0
    _
  %s9 = ssub.s32 1, %s7
  %s10 = scalar_select 0, %s9, %s7
  $region1: #{tpu_custom_call.1} parent=0
    #allocation3 [shape = 'u8[8192]{0}', space=vmem, size = 0x2000, scoped, tag = 'input window, operand 0, single buffered']
    #allocation4 [shape = 's32[1]{0}', space=sflag, size = 0x4, scoped, tag = 'scoped memory for tpu_custom_call.1']
    #allocation5 [shape = 's32[1]{0}', space=sflag, size = 0x4, scoped, tag = 'scoped memory for tpu_custom_call.1']
    #allocation6 [shape = 'u8[65536]{0}', space=vmem, size = 0x10000, scoped, tag = 'input window, operand 1, single buffered']
    #allocation7 [shape = 's32[1]{0}', space=sflag, size = 0x4, scoped, tag = 'scoped memory for tpu_custom_call.1']
    #allocation8 [shape = 'u8[65536]{0}', space=vmem, size = 0x10000, scoped, tag = 'input window, operand 2, single buffered']
    #allocation9 [shape = 'u8[8192]{0}', space=vmem, size = 0x2000, scoped, tag = 'output window, operand 0, single buffered']
    #allocation10 [shape = 'u8[8192]{0}', space=vmem, size = 0x2000, scoped, tag = 'output window, operand 1, single buffered']
    #allocation11 [shape = 's32[1]{0}', space=sflag, size = 0x4, scoped, tag = 'scoped memory for tpu_custom_call.1']
    %11 = vsyncpa [#allocation4], 0
    %12 = vsyncpa [#allocation7], 0
    %13 = vsyncpa [#allocation5], 0
    %14 = vsyncpa [#allocation11], 0
    // Predicated region
    $region2: #{tpu_custom_call.1} parent=1 // pred_check
      _
    $region3: #{tpu_custom_call.1} parent=1 // pred_check_branch
      %16 = sbr.rel (0) target = $region5
    $region4: #{tpu_custom_call.1} parent=1 // pred_region
      %s18 = ssub.s32 256, 256
      %19 = vsyncadd [#allocation4], %s18
      %s20 = sshll.u32 [#allocation3], 4
      %s21 = int_to_ptr.vmem [resolvable:$true] %s20
      %26 = dma.hbm_to_vmem [thread:$0]  %s0, 256, %s21, [#allocation4], 128, 128, 8
    $region5: #{tpu_custom_call.1} parent=1 // pred_fallthru
      _
    // Predicated region
    $region6: #{tpu_custom_call.1} parent=1 // pred_check
      _
    $region7: #{tpu_custom_call.1} parent=1 // pred_check_branch
      %28 = sbr.rel (0) target = $region9
    $region8: #{tpu_custom_call.1} parent=1 // pred_region
      %s30 = ssub.s32 2048, 2048
      %31 = vsyncadd [#allocation7], %s30
      %s32 = sshll.u32 [#allocation6], 4
      %s33 = int_to_ptr.vmem [resolvable:$true] %s32
      %38 = dma.hbm_to_vmem [thread:$0]  %s1, 2048, %s33, [#allocation7], 256, 256, 16
    $region9: #{tpu_custom_call.1} parent=1 // pred_fallthru
      _
    // Predicated region
    $region10: #{tpu_custom_call.1} parent=1 // pred_check
      _
    $region11: #{tpu_custom_call.1} parent=1 // pred_check_branch
      %40 = sbr.rel (0) target = $region13
    $region12: #{tpu_custom_call.1} parent=1 // pred_region
      %s42 = ssub.s32 2048, 2048
      %43 = vsyncadd [#allocation7], %s42
      %s44 = sshll.u32 [#allocation8], 4
      %s45 = int_to_ptr.vmem [resolvable:$true] %s44
      %50 = dma.hbm_to_vmem [thread:$0]  %s2, 2048, %s45, [#allocation7], 256, 256, 16
    $region13: #{tpu_custom_call.1} parent=1 // pred_fallthru
      _
    // Predicated region
    $region14: #{tpu_custom_call.1} parent=1 // pred_check
      _
    $region15: #{tpu_custom_call.1} parent=1 // pred_check_branch
      %52 = sbr.rel (0) target = $region17
    $region16: #{tpu_custom_call.1} parent=1 // pred_region
      _
    $region17: #{tpu_custom_call.1} parent=1 // pred_fallthru
      _
    // Predicated region
    $region18: #{tpu_custom_call.1} parent=1 // pred_check
      _
    $region19: #{tpu_custom_call.1} parent=1 // pred_check_branch
      %54 = sbr.rel (0) target = $region21
    $region20: #{tpu_custom_call.1} parent=1 // pred_region
      %55 = dma.done [#allocation4], 256
    $region21: #{tpu_custom_call.1} parent=1 // pred_fallthru
      _
    // Predicated region
    $region22: #{tpu_custom_call.1} parent=1 // pred_check
      _
    $region23: #{tpu_custom_call.1} parent=1 // pred_check_branch
      %57 = sbr.rel (0) target = $region25
    $region24: #{tpu_custom_call.1} parent=1 // pred_region
      %58 = dma.done [#allocation7], 2048
    $region25: #{tpu_custom_call.1} parent=1 // pred_fallthru
      _
    // Predicated region
    $region26: #{tpu_custom_call.1} parent=1 // pred_check
      _
    $region27: #{tpu_custom_call.1} parent=1 // pred_check_branch
      %60 = sbr.rel (0) target = $region29
    $region28: #{tpu_custom_call.1} parent=1 // pred_region
      %61 = dma.done [#allocation7], 2048
    $region29: #{tpu_custom_call.1} parent=1 // pred_fallthru
      _
    %v62 = vld [vmem:[#allocation3] sm:$0xff]
    %v63 = vld [vmem:[#allocation3 + $0x8] sm:$0xff]
    %v64 = vld [vmem:[#allocation6] sm:$0xff]
    %v65 = vld [vmem:[#allocation6 + $0x8] sm:$0xff]
    %v66 = vld [vmem:[#allocation6 + $0x10] sm:$0xff]
    %v67 = vld [vmem:[#allocation6 + $0x18] sm:$0xff]
    %v68 = vld [vmem:[#allocation6 + $0x20] sm:$0xff]
    %v69 = vld [vmem:[#allocation6 + $0x28] sm:$0xff]
    %v70 = vld [vmem:[#allocation6 + $0x30] sm:$0xff]
    %v71 = vld [vmem:[#allocation6 + $0x38] sm:$0xff]
    %v72 = vld [vmem:[#allocation6 + $0x40] sm:$0xff]
    %v73 = vld [vmem:[#allocation6 + $0x48] sm:$0xff]
    %v74 = vld [vmem:[#allocation6 + $0x50] sm:$0xff]
    %v75 = vld [vmem:[#allocation6 + $0x58] sm:$0xff]
    %v76 = vld [vmem:[#allocation6 + $0x60] sm:$0xff]
    %v77 = vld [vmem:[#allocation6 + $0x68] sm:$0xff]
    %v78 = vld [vmem:[#allocation6 + $0x70] sm:$0xff]
    %v79 = vld [vmem:[#allocation6 + $0x78] sm:$0xff]
    %v80 = vld [vmem:[%s3] sm:$0x3]
    %v82 = vlaneseq
    %v83 = vshrl.u32 %v82, 7
    %v84 = vsub.s32 0, %v83
    %v85 = vrot.slane %v80, %v84
    %v86 = vlaneseq
    %v87 = vshrl.u32 %v86, 7
    %v88 = vsub.s32 1, %v87
    %v89 = vrot.slane %v80, %v88
    %vm92 = vcmask 523264
    %v94 = vsel %vm92, %v62, 0
    %v97 = vsel %vm92, %v63, 0
    %99 = vmatprep.subr.mxu0 %v65
    %100 = vmatpush1.msra.mxu0 %v64
    %101 = vmatprep.subr.mxu0 %v67
    %102 = vmatpush1.msra.mxu0 %v66
    %103 = vmatprep.subr.mxu0 %v69
    %104 = vmatpush1.msra.mxu0 %v68
    %105 = vmatprep.subr.mxu0 %v71
    %106 = vmatpush1.msra.mxu0 %v70
    %107 = vmatprep.subr.mxu0 %v73
    %108 = vmatpush1.msra.mxu0 %v72
    %109 = vmatprep.subr.mxu0 %v75
    %110 = vmatpush1.msra.mxu0 %v74
    %111 = vmatprep.subr.mxu0 %v77
    %112 = vmatpush1.msra.mxu0 %v76
    %113 = vmatprep.subr.mxu0 %v79
    %114 = vmatpush1.msra.mxu0 %v78
    %115 = vmatprep.subr.mxu0 0.0
    %116 = vmatpush1.msra.mxu0 0.0
    %117 = vmatprep.subr.mxu0 0.0
    %118 = vmatpush1.msra.mxu0 0.0
    %119 = vmatprep.subr.mxu0 0.0
    %120 = vmatpush1.msra.mxu0 0.0
    %121 = vmatprep.subr.mxu0 0.0
    %122 = vmatpush1.msra.mxu0 0.0
    %123 = vmatprep.subr.mxu0 0.0
    %124 = vmatpush1.msra.mxu0 0.0
    %125 = vmatprep.subr.mxu0 0.0
    %126 = vmatpush1.msra.mxu0 0.0
    %127 = vmatprep.subr.mxu0 0.0
    %128 = vmatpush1.msra.mxu0 0.0
    %129 = vmatprep.subr.mxu0 0.0
    %130 = vmatpush1.msra.mxu0 0.0
    %131 = vmatprep.subr.mxu0 0.0
    %132 = vmatpush1.msra.mxu0 0.0
    %133 = vmatprep.subr.mxu0 0.0
    %134 = vmatpush1.msra.mxu0 0.0
    %135 = vmatprep.subr.mxu0 0.0
    %136 = vmatpush1.msra.mxu0 0.0
    %137 = vmatprep.subr.mxu0 0.0
    %138 = vmatpush1.msra.mxu0 0.0
    %139 = vmatprep.subr.mxu0 0.0
    %140 = vmatpush1.msra.mxu0 0.0
    %141 = vmatprep.subr.mxu0 0.0
    %142 = vmatpush1.msra.mxu0 0.0
    %143 = vmatprep.subr.mxu0 0.0
    %144 = vmatpush1.msra.mxu0 0.0
    %145 = vmatprep.subr.mxu0 0.0
    %146 = vmatpush1.msra.mxu0 0.0
    %147 = vmatprep.subr.mxu0 0.0
    %148 = vmatpush1.msra.mxu0 0.0
    %149 = vmatprep.subr.mxu0 0.0
    %150 = vmatpush1.msra.mxu0 0.0
    %151 = vmatprep.subr.mxu0 0.0
    %152 = vmatpush1.msra.mxu0 0.0
    %153 = vmatprep.subr.mxu0 0.0
    %154 = vmatpush1.msra.mxu0 0.0
    %155 = vmatprep.subr.mxu0 0.0
    %156 = vmatpush1.msra.mxu0 0.0
    %157 = vmatprep.subr.mxu0 0.0
    %158 = vmatpush1.msra.mxu0 0.0
    %159 = vmatprep.subr.mxu0 0.0
    %160 = vmatpush1.msra.mxu0 0.0
    %161 = vmatprep.subr.mxu0 0.0
    %162 = vmatpush1.msra.mxu0 0.0
    %163 = vmatprep.mubr.f32.mxu0 0.0
    %164 = vmatmul.mubr.f32.gmra.mrb[0].mxu0 %v94
    %v165 = vpop.f32.mrb[0].mxu0
    %v166 = vadd.f32 %v85, %v165
    %v167 = vpop.f32.mrb[0].mxu0
    %v168 = vadd.f32 %v89, %v167
    %169 = vmatprep.mubr.f32.mxu0 0.0
    %170 = vmatmul.mubr.f32.gmra.mrb[0].mxu0 %v97
    %v171 = vpop.f32.mrb[0].mxu0
    %v172 = vadd.f32 %v85, %v171
    %v173 = vpop.f32.mrb[0].mxu0
    %v174 = vadd.f32 %v89, %v173
    %175 = vdwg.mxu0
    %176 = vst [vmem:[#allocation2] sm:$0xff] %v166
    %177 = vst [vmem:[#allocation2 + $0x8] sm:$0xff] %v168
    %178 = vst [vmem:[#allocation2 + $0x10] sm:$0xff] %v172
    %179 = vst [vmem:[#allocation2 + $0x18] sm:$0xff] %v174
    %v180 = vld [vmem:[#allocation8] sm:$0xff]
    %v181 = vld [vmem:[#allocation8 + $0x8] sm:$0xff]
    %v182 = vld [vmem:[#allocation8 + $0x10] sm:$0xff]
    %v183 = vld [vmem:[#allocation8 + $0x18] sm:$0xff]
    %v184 = vld [vmem:[#allocation8 + $0x20] sm:$0xff]
    %v185 = vld [vmem:[#allocation8 + $0x28] sm:$0xff]
    %v186 = vld [vmem:[#allocation8 + $0x30] sm:$0xff]
    %v187 = vld [vmem:[#allocation8 + $0x38] sm:$0xff]
    %v188 = vld [vmem:[#allocation8 + $0x40] sm:$0xff]
    %v189 = vld [vmem:[#allocation8 + $0x48] sm:$0xff]
    %v190 = vld [vmem:[#allocation8 + $0x50] sm:$0xff]
    %v191 = vld [vmem:[#allocation8 + $0x58] sm:$0xff]
    %v192 = vld [vmem:[#allocation8 + $0x60] sm:$0xff]
    %v193 = vld [vmem:[#allocation8 + $0x68] sm:$0xff]
    %v194 = vld [vmem:[#allocation8 + $0x70] sm:$0xff]
    %v195 = vld [vmem:[#allocation8 + $0x78] sm:$0xff]
    %v196 = vld [vmem:[#allocation2] sm:$0x3]
    %v197 = vld [vmem:[#allocation2 + $0x8] sm:$0x3]
    %v199 = vsel %vm92, 0.0, 0
    %201 = vmatprep.subr.mxu0 %v181
    %202 = vmatpush1.msra.mxu0 %v180
    %203 = vmatprep.subr.mxu0 %v183
    %204 = vmatpush1.msra.mxu0 %v182
    %205 = vmatprep.subr.mxu0 %v185
    %206 = vmatpush1.msra.mxu0 %v184
    %207 = vmatprep.subr.mxu0 %v187
    %208 = vmatpush1.msra.mxu0 %v186
    %209 = vmatprep.subr.mxu0 %v189
    %210 = vmatpush1.msra.mxu0 %v188
    %211 = vmatprep.subr.mxu0 %v191
    %212 = vmatpush1.msra.mxu0 %v190
    %213 = vmatprep.subr.mxu0 %v193
    %214 = vmatpush1.msra.mxu0 %v192
    %215 = vmatprep.subr.mxu0 %v195
    %216 = vmatpush1.msra.mxu0 %v194
    %217 = vmatprep.subr.mxu0 0.0
    %218 = vmatpush1.msra.mxu0 0.0
    %219 = vmatprep.subr.mxu0 0.0
    %220 = vmatpush1.msra.mxu0 0.0
    %221 = vmatprep.subr.mxu0 0.0
    %222 = vmatpush1.msra.mxu0 0.0
    %223 = vmatprep.subr.mxu0 0.0
    %224 = vmatpush1.msra.mxu0 0.0
    %225 = vmatprep.subr.mxu0 0.0
    %226 = vmatpush1.msra.mxu0 0.0
    %227 = vmatprep.subr.mxu0 0.0
    %228 = vmatpush1.msra.mxu0 0.0
    %229 = vmatprep.subr.mxu0 0.0
    %230 = vmatpush1.msra.mxu0 0.0
    %231 = vmatprep.subr.mxu0 0.0
    %232 = vmatpush1.msra.mxu0 0.0
    %233 = vmatprep.subr.mxu0 0.0
    %234 = vmatpush1.msra.mxu0 0.0
    %235 = vmatprep.subr.mxu0 0.0
    %236 = vmatpush1.msra.mxu0 0.0
    %237 = vmatprep.subr.mxu0 0.0
    %238 = vmatpush1.msra.mxu0 0.0
    %239 = vmatprep.subr.mxu0 0.0
    %240 = vmatpush1.msra.mxu0 0.0
    %241 = vmatprep.subr.mxu0 0.0
    %242 = vmatpush1.msra.mxu0 0.0
    %243 = vmatprep.subr.mxu0 0.0
    %244 = vmatpush1.msra.mxu0 0.0
    %245 = vmatprep.subr.mxu0 0.0
    %246 = vmatpush1.msra.mxu0 0.0
    %247 = vmatprep.subr.mxu0 0.0
    %248 = vmatpush1.msra.mxu0 0.0
    %249 = vmatprep.subr.mxu0 0.0
    %250 = vmatpush1.msra.mxu0 0.0
    %251 = vmatprep.subr.mxu0 0.0
    %252 = vmatpush1.msra.mxu0 0.0
    %253 = vmatprep.subr.mxu0 0.0
    %254 = vmatpush1.msra.mxu0 0.0
    %255 = vmatprep.subr.mxu0 0.0
    %256 = vmatpush1.msra.mxu0 0.0
    %257 = vmatprep.subr.mxu0 0.0
    %258 = vmatpush1.msra.mxu0 0.0
    %259 = vmatprep.subr.mxu0 0.0
    %260 = vmatpush1.msra.mxu0 0.0
    %261 = vmatprep.subr.mxu0 0.0
    %262 = vmatpush1.msra.mxu0 0.0
    %263 = vmatprep.subr.mxu0 0.0
    %264 = vmatpush1.msra.mxu0 0.0
    %265 = vmatprep.mubr.f32.mxu0 0.0
    %266 = vmatmul.mubr.f32.gmra.mrb[0].mxu0 %v199
    %v267 = vpop.f32.mrb[0].mxu0
    %v268 = vadd.f32 0.0, %v267
    %v269 = vpop.f32.mrb[0].mxu0
    %v270 = vadd.f32 0.0, %v269
    %271 = vdwg.mxu0
    %v272 = vadd.f32 %v196, %v268
    %v273 = vadd.f32 %v197, %v270
    %v274 = vxor.u32 %v272, 2147483648
    %v275 = vmul.f32 %v274, 1.442695
    %v276 = vpow.pop %v275
    %v277 = vadd.f32 %v276, 1.0
    %v278 = vrcp.pop %v277
    %v279 = vmul.f32 1.0, %v278
    %v280 = vtanh.pop %v273
    %v281 = vxor.u32 %v273, 2147483648
    %v282 = vmul.f32 %v281, 1.442695
    %v283 = vpow.pop %v282
    %v284 = vadd.f32 %v283, 1.0
    %v285 = vrcp.pop %v284
    %v286 = vmul.f32 1.0, %v285
    %v287 = vmul.f32 %v279, 0.0
    %v288 = vmul.f32 %v279, %v280
    %290 = vrot.lane.b32.xlu0 %v288, 64
    %v291 = vpop.permute.xlu0 %290
    %v293 = vadd.f32 %v287, %v291
    %v294 = vtanh.pop %v293
    %v295 = vmul.f32 %v286, %v294
    %297 = vrot.lane.b32.xlu0 %v295, 64
    %v298 = vpop.permute.xlu0 %297
    %vm300 = vcmask 254976
    %301 = vst.msk [vmem:[#allocation9] sm:$0x3] %vm300, %v298
    %302 = vrot.lane.b32.xlu0 %v295, 32
    %v303 = vpop.permute.xlu0 %302
    %s305 = scalar_lea.vmem [#allocation10], 14
    %306 = vst.msk [vmem:[%s305] sm:$0x3] %vm300, %v303
    %v307 = vld [vmem:[#allocation2] sm:$0xc]
    %v308 = vld [vmem:[#allocation2 + $0x8] sm:$0xc]
    %v309 = vsel %vm92, %v298, 0
    %311 = vmatprep.subr.mxu0 %v181
    %312 = vmatpush1.msra.mxu0 %v180
    %313 = vmatprep.subr.mxu0 %v183
    %314 = vmatpush1.msra.mxu0 %v182
    %315 = vmatprep.subr.mxu0 %v185
    %316 = vmatpush1.msra.mxu0 %v184
    %317 = vmatprep.subr.mxu0 %v187
    %318 = vmatpush1.msra.mxu0 %v186
    %319 = vmatprep.subr.mxu0 %v189
    %320 = vmatpush1.msra.mxu0 %v188
    %321 = vmatprep.subr.mxu0 %v191
    %322 = vmatpush1.msra.mxu0 %v190
    %323 = vmatprep.subr.mxu0 %v193
    %324 = vmatpush1.msra.mxu0 %v192
    %325 = vmatprep.subr.mxu0 %v195
    %326 = vmatpush1.msra.mxu0 %v194
    %327 = vmatprep.subr.mxu0 0.0
    %328 = vmatpush1.msra.mxu0 0.0
    %329 = vmatprep.subr.mxu0 0.0
    %330 = vmatpush1.msra.mxu0 0.0
    %331 = vmatprep.subr.mxu0 0.0
    %332 = vmatpush1.msra.mxu0 0.0
    %333 = vmatprep.subr.mxu0 0.0
    %334 = vmatpush1.msra.mxu0 0.0
    %335 = vmatprep.subr.mxu0 0.0
    %336 = vmatpush1.msra.mxu0 0.0
    %337 = vmatprep.subr.mxu0 0.0
    %338 = vmatpush1.msra.mxu0 0.0
    %339 = vmatprep.subr.mxu0 0.0
    %340 = vmatpush1.msra.mxu0 0.0
    %341 = vmatprep.subr.mxu0 0.0
    %342 = vmatpush1.msra.mxu0 0.0
    %343 = vmatprep.subr.mxu0 0.0
    %344 = vmatpush1.msra.mxu0 0.0
    %345 = vmatprep.subr.mxu0 0.0
    %346 = vmatpush1.msra.mxu0 0.0
    %347 = vmatprep.subr.mxu0 0.0
    %348 = vmatpush1.msra.mxu0 0.0
    %349 = vmatprep.subr.mxu0 0.0
    %350 = vmatpush1.msra.mxu0 0.0
    %351 = vmatprep.subr.mxu0 0.0
    %352 = vmatpush1.msra.mxu0 0.0
    %353 = vmatprep.subr.mxu0 0.0
    %354 = vmatpush1.msra.mxu0 0.0
    %355 = vmatprep.subr.mxu0 0.0
    %356 = vmatpush1.msra.mxu0 0.0
    %357 = vmatprep.subr.mxu0 0.0
    %358 = vmatpush1.msra.mxu0 0.0
    %359 = vmatprep.subr.mxu0 0.0
    %360 = vmatpush1.msra.mxu0 0.0
    %361 = vmatprep.subr.mxu0 0.0
    %362 = vmatpush1.msra.mxu0 0.0
    %363 = vmatprep.subr.mxu0 0.0
    %364 = vmatpush1.msra.mxu0 0.0
    %365 = vmatprep.subr.mxu0 0.0
    %366 = vmatpush1.msra.mxu0 0.0
    %367 = vmatprep.subr.mxu0 0.0
    %368 = vmatpush1.msra.mxu0 0.0
    %369 = vmatprep.subr.mxu0 0.0
    %370 = vmatpush1.msra.mxu0 0.0
    %371 = vmatprep.subr.mxu0 0.0
    %372 = vmatpush1.msra.mxu0 0.0
    %373 = vmatprep.subr.mxu0 0.0
    %374 = vmatpush1.msra.mxu0 0.0
    %375 = vmatprep.mubr.f32.mxu0 0.0
    %376 = vmatmul.mubr.f32.gmra.mrb[0].mxu0 %v309
    %v377 = vpop.f32.mrb[0].mxu0
    %v378 = vadd.f32 0.0, %v377
    %v379 = vpop.f32.mrb[0].mxu0
    %v380 = vadd.f32 0.0, %v379
    %381 = vdwg.mxu0
    %v384 = vrot.slane %v378, 6
    %v385 = vrot.slane %v380, 6
    %v388 = vadd.f32 %v307, %v384
    %v389 = vadd.f32 %v308, %v385
    %v390 = vxor.u32 %v388, 2147483648
    %v391 = vmul.f32 %v390, 1.442695
    %v392 = vpow.pop %v391
    %v393 = vadd.f32 %v392, 1.0
    %v394 = vrcp.pop %v393
    %v395 = vmul.f32 1.0, %v394
    %v396 = vtanh.pop %v389
    %v397 = vxor.u32 %v389, 2147483648
    %v398 = vmul.f32 %v397, 1.442695
    %v399 = vpow.pop %v398
    %v400 = vadd.f32 %v399, 1.0
    %v401 = vrcp.pop %v400
    %v402 = vmul.f32 1.0, %v401
    %v404 = vrot.slane %v293, 6
    %v406 = vmul.f32 %v395, %v404
    %v407 = vmul.f32 %v395, %v396
    %409 = vrot.lane.b32.xlu0 %v407, 64
    %v410 = vpop.permute.xlu0 %409
    %v412 = vadd.f32 %v406, %v410
    %v413 = vtanh.pop %v412
    %v414 = vmul.f32 %v402, %v413
    %416 = vrot.lane.b32.xlu0 %v414, 64
    %v417 = vpop.permute.xlu0 %416
    %s419 = scalar_lea.vmem [#allocation9], 2
    %vm420 = vcmask 257026
    %421 = vst.msk [vmem:[%s419 - $0x2] sm:$0xc] %vm420, %v417
    %422 = vrot.lane.b32.xlu0 %v414, 32
    %v423 = vpop.permute.xlu0 %422
    %s425 = scalar_lea.vmem [#allocation10], 12
    %426 = vst.msk [vmem:[%s425 - $0x2] sm:$0xc] %vm420, %v423
    %v427 = vld [vmem:[#allocation2] sm:$0x30]
    %v428 = vld [vmem:[#allocation2 + $0x8] sm:$0x30]
    %v429 = vrot.slane %v414, 2
    %430 = vrot.lane.b32.xlu0 %v429, 64
    %v431 = vpop.permute.xlu0 %430
    %v432 = vsel %vm92, %v431, 0
    %434 = vmatprep.subr.mxu0 %v181
    %435 = vmatpush1.msra.mxu0 %v180
    %436 = vmatprep.subr.mxu0 %v183
    %437 = vmatpush1.msra.mxu0 %v182
    %438 = vmatprep.subr.mxu0 %v185
    %439 = vmatpush1.msra.mxu0 %v184
    %440 = vmatprep.subr.mxu0 %v187
    %441 = vmatpush1.msra.mxu0 %v186
    %442 = vmatprep.subr.mxu0 %v189
    %443 = vmatpush1.msra.mxu0 %v188
    %444 = vmatprep.subr.mxu0 %v191
    %445 = vmatpush1.msra.mxu0 %v190
    %446 = vmatprep.subr.mxu0 %v193
    %447 = vmatpush1.msra.mxu0 %v192
    %448 = vmatprep.subr.mxu0 %v195
    %449 = vmatpush1.msra.mxu0 %v194
    %450 = vmatprep.subr.mxu0 0.0
    %451 = vmatpush1.msra.mxu0 0.0
    %452 = vmatprep.subr.mxu0 0.0
    %453 = vmatpush1.msra.mxu0 0.0
    %454 = vmatprep.subr.mxu0 0.0
    %455 = vmatpush1.msra.mxu0 0.0
    %456 = vmatprep.subr.mxu0 0.0
    %457 = vmatpush1.msra.mxu0 0.0
    %458 = vmatprep.subr.mxu0 0.0
    %459 = vmatpush1.msra.mxu0 0.0
    %460 = vmatprep.subr.mxu0 0.0
    %461 = vmatpush1.msra.mxu0 0.0
    %462 = vmatprep.subr.mxu0 0.0
    %463 = vmatpush1.msra.mxu0 0.0
    %464 = vmatprep.subr.mxu0 0.0
    %465 = vmatpush1.msra.mxu0 0.0
    %466 = vmatprep.subr.mxu0 0.0
    %467 = vmatpush1.msra.mxu0 0.0
    %468 = vmatprep.subr.mxu0 0.0
    %469 = vmatpush1.msra.mxu0 0.0
    %470 = vmatprep.subr.mxu0 0.0
    %471 = vmatpush1.msra.mxu0 0.0
    %472 = vmatprep.subr.mxu0 0.0
    %473 = vmatpush1.msra.mxu0 0.0
    %474 = vmatprep.subr.mxu0 0.0
    %475 = vmatpush1.msra.mxu0 0.0
    %476 = vmatprep.subr.mxu0 0.0
    %477 = vmatpush1.msra.mxu0 0.0
    %478 = vmatprep.subr.mxu0 0.0
    %479 = vmatpush1.msra.mxu0 0.0
    %480 = vmatprep.subr.mxu0 0.0
    %481 = vmatpush1.msra.mxu0 0.0
    %482 = vmatprep.subr.mxu0 0.0
    %483 = vmatpush1.msra.mxu0 0.0
    %484 = vmatprep.subr.mxu0 0.0
    %485 = vmatpush1.msra.mxu0 0.0
    %486 = vmatprep.subr.mxu0 0.0
    %487 = vmatpush1.msra.mxu0 0.0
    %488 = vmatprep.subr.mxu0 0.0
    %489 = vmatpush1.msra.mxu0 0.0
    %490 = vmatprep.subr.mxu0 0.0
    %491 = vmatpush1.msra.mxu0 0.0
    %492 = vmatprep.subr.mxu0 0.0
    %493 = vmatpush1.msra.mxu0 0.0
    %494 = vmatprep.subr.mxu0 0.0
    %495 = vmatpush1.msra.mxu0 0.0
    %496 = vmatprep.subr.mxu0 0.0
    %497 = vmatpush1.msra.mxu0 0.0
    %498 = vmatprep.mubr.f32.mxu0 0.0
    %499 = vmatmul.mubr.f32.gmra.mrb[0].mxu0 %v432
    %v500 = vpop.f32.mrb[0].mxu0
    %v501 = vadd.f32 0.0, %v500
    %v502 = vpop.f32.mrb[0].mxu0
    %v503 = vadd.f32 0.0, %v502
    %504 = vdwg.mxu0
    %v507 = vrot.slane %v501, 4
    %v508 = vrot.slane %v503, 4
    %v511 = vadd.f32 %v427, %v507
    %v512 = vadd.f32 %v428, %v508
    %v513 = vxor.u32 %v511, 2147483648
    %v514 = vmul.f32 %v513, 1.442695
    %v515 = vpow.pop %v514
    %v516 = vadd.f32 %v515, 1.0
    %v517 = vrcp.pop %v516
    %v518 = vmul.f32 1.0, %v517
    %v519 = vtanh.pop %v512
    %v520 = vxor.u32 %v512, 2147483648
    %v521 = vmul.f32 %v520, 1.442695
    %v522 = vpow.pop %v521
    %v523 = vadd.f32 %v522, 1.0
    %v524 = vrcp.pop %v523
    %v525 = vmul.f32 1.0, %v524
    %v527 = vrot.slane %v412, 6
    %v529 = vmul.f32 %v518, %v527
    %v530 = vmul.f32 %v518, %v519
    %532 = vrot.lane.b32.xlu0 %v530, 64
    %v533 = vpop.permute.xlu0 %532
    %v535 = vadd.f32 %v529, %v533
    %v536 = vtanh.pop %v535
    %v537 = vmul.f32 %v525, %v536
    %539 = vrot.lane.b32.xlu0 %v537, 64
    %v540 = vpop.permute.xlu0 %539
    %s542 = scalar_lea.vmem [#allocation9], 4
    %vm543 = vcmask 259076
    %544 = vst.msk [vmem:[%s542 - $0x4] sm:$0x30] %vm543, %v540
    %545 = vrot.lane.b32.xlu0 %v537, 32
    %v546 = vpop.permute.xlu0 %545
    %s548 = scalar_lea.vmem [#allocation10], 10
    %549 = vst.msk [vmem:[%s548 - $0x4] sm:$0x30] %vm543, %v546
    %v550 = vld [vmem:[#allocation2] sm:$0xc0]
    %v551 = vld [vmem:[#allocation2 + $0x8] sm:$0xc0]
    %v552 = vrot.slane %v537, 4
    %553 = vrot.lane.b32.xlu0 %v552, 64
    %v554 = vpop.permute.xlu0 %553
    %v555 = vsel %vm92, %v554, 0
    %557 = vmatprep.subr.mxu0 %v181
    %558 = vmatpush1.msra.mxu0 %v180
    %559 = vmatprep.subr.mxu0 %v183
    %560 = vmatpush1.msra.mxu0 %v182
    %561 = vmatprep.subr.mxu0 %v185
    %562 = vmatpush1.msra.mxu0 %v184
    %563 = vmatprep.subr.mxu0 %v187
    %564 = vmatpush1.msra.mxu0 %v186
    %565 = vmatprep.subr.mxu0 %v189
    %566 = vmatpush1.msra.mxu0 %v188
    %567 = vmatprep.subr.mxu0 %v191
    %568 = vmatpush1.msra.mxu0 %v190
    %569 = vmatprep.subr.mxu0 %v193
    %570 = vmatpush1.msra.mxu0 %v192
    %571 = vmatprep.subr.mxu0 %v195
    %572 = vmatpush1.msra.mxu0 %v194
    %573 = vmatprep.subr.mxu0 0.0
    %574 = vmatpush1.msra.mxu0 0.0
    %575 = vmatprep.subr.mxu0 0.0
    %576 = vmatpush1.msra.mxu0 0.0
    %577 = vmatprep.subr.mxu0 0.0
    %578 = vmatpush1.msra.mxu0 0.0
    %579 = vmatprep.subr.mxu0 0.0
    %580 = vmatpush1.msra.mxu0 0.0
    %581 = vmatprep.subr.mxu0 0.0
    %582 = vmatpush1.msra.mxu0 0.0
    %583 = vmatprep.subr.mxu0 0.0
    %584 = vmatpush1.msra.mxu0 0.0
    %585 = vmatprep.subr.mxu0 0.0
    %586 = vmatpush1.msra.mxu0 0.0
    %587 = vmatprep.subr.mxu0 0.0
    %588 = vmatpush1.msra.mxu0 0.0
    %589 = vmatprep.subr.mxu0 0.0
    %590 = vmatpush1.msra.mxu0 0.0
    %591 = vmatprep.subr.mxu0 0.0
    %592 = vmatpush1.msra.mxu0 0.0
    %593 = vmatprep.subr.mxu0 0.0
    %594 = vmatpush1.msra.mxu0 0.0
    %595 = vmatprep.subr.mxu0 0.0
    %596 = vmatpush1.msra.mxu0 0.0
    %597 = vmatprep.subr.mxu0 0.0
    %598 = vmatpush1.msra.mxu0 0.0
    %599 = vmatprep.subr.mxu0 0.0
    %600 = vmatpush1.msra.mxu0 0.0
    %601 = vmatprep.subr.mxu0 0.0
    %602 = vmatpush1.msra.mxu0 0.0
    %603 = vmatprep.subr.mxu0 0.0
    %604 = vmatpush1.msra.mxu0 0.0
    %605 = vmatprep.subr.mxu0 0.0
    %606 = vmatpush1.msra.mxu0 0.0
    %607 = vmatprep.subr.mxu0 0.0
    %608 = vmatpush1.msra.mxu0 0.0
    %609 = vmatprep.subr.mxu0 0.0
    %610 = vmatpush1.msra.mxu0 0.0
    %611 = vmatprep.subr.mxu0 0.0
    %612 = vmatpush1.msra.mxu0 0.0
    %613 = vmatprep.subr.mxu0 0.0
    %614 = vmatpush1.msra.mxu0 0.0
    %615 = vmatprep.subr.mxu0 0.0
    %616 = vmatpush1.msra.mxu0 0.0
    %617 = vmatprep.subr.mxu0 0.0
    %618 = vmatpush1.msra.mxu0 0.0
    %619 = vmatprep.subr.mxu0 0.0
    %620 = vmatpush1.msra.mxu0 0.0
    %621 = vmatprep.mubr.f32.mxu0 0.0
    %622 = vmatmul.mubr.f32.gmra.mrb[0].mxu0 %v555
    %v623 = vpop.f32.mrb[0].mxu0
    %v624 = vadd.f32 0.0, %v623
    %v625 = vpop.f32.mrb[0].mxu0
    %v626 = vadd.f32 0.0, %v625
    %627 = vdwg.mxu0
    %v630 = vrot.slane %v624, 2
    %v631 = vrot.slane %v626, 2
    %v634 = vadd.f32 %v550, %v630
    %v635 = vadd.f32 %v551, %v631
    %v636 = vxor.u32 %v634, 2147483648
    %v637 = vmul.f32 %v636, 1.442695
    %v638 = vpow.pop %v637
    %v639 = vadd.f32 %v638, 1.0
    %v640 = vrcp.pop %v639
    %v641 = vmul.f32 1.0, %v640
    %v642 = vtanh.pop %v635
    %v643 = vxor.u32 %v635, 2147483648
    %v644 = vmul.f32 %v643, 1.442695
    %v645 = vpow.pop %v644
    %v646 = vadd.f32 %v645, 1.0
    %v647 = vrcp.pop %v646
    %v648 = vmul.f32 1.0, %v647
    %v650 = vrot.slane %v535, 6
    %v652 = vmul.f32 %v641, %v650
    %v653 = vmul.f32 %v641, %v642
    %655 = vrot.lane.b32.xlu0 %v653, 64
    %v656 = vpop.permute.xlu0 %655
    %v658 = vadd.f32 %v652, %v656
    %v659 = vtanh.pop %v658
    %v660 = vmul.f32 %v648, %v659
    %662 = vrot.lane.b32.xlu0 %v660, 64
    %v663 = vpop.permute.xlu0 %662
    %s665 = scalar_lea.vmem [#allocation9], 6
    %vm666 = vcmask 261126
    %667 = vst.msk [vmem:[%s665 - $0x6] sm:$0xc0] %vm666, %v663
    %668 = vrot.lane.b32.xlu0 %v660, 32
    %v669 = vpop.permute.xlu0 %668
    %s671 = scalar_lea.vmem [#allocation10], 8
    %672 = vst.msk [vmem:[%s671 - $0x6] sm:$0xc0] %vm666, %v669
    %v673 = vld [vmem:[#allocation2 + $0x10] sm:$0x3]
    %v674 = vld [vmem:[#allocation2 + $0x18] sm:$0x3]
    %v675 = vrot.slane %v660, 6
    %676 = vrot.lane.b32.xlu0 %v675, 64
    %v677 = vpop.permute.xlu0 %676
    %v678 = vsel %vm92, %v677, 0
    %680 = vmatprep.subr.mxu0 %v181
    %681 = vmatpush1.msra.mxu0 %v180
    %682 = vmatprep.subr.mxu0 %v183
    %683 = vmatpush1.msra.mxu0 %v182
    %684 = vmatprep.subr.mxu0 %v185
    %685 = vmatpush1.msra.mxu0 %v184
    %686 = vmatprep.subr.mxu0 %v187
    %687 = vmatpush1.msra.mxu0 %v186
    %688 = vmatprep.subr.mxu0 %v189
    %689 = vmatpush1.msra.mxu0 %v188
    %690 = vmatprep.subr.mxu0 %v191
    %691 = vmatpush1.msra.mxu0 %v190
    %692 = vmatprep.subr.mxu0 %v193
    %693 = vmatpush1.msra.mxu0 %v192
    %694 = vmatprep.subr.mxu0 %v195
    %695 = vmatpush1.msra.mxu0 %v194
    %696 = vmatprep.subr.mxu0 0.0
    %697 = vmatpush1.msra.mxu0 0.0
    %698 = vmatprep.subr.mxu0 0.0
    %699 = vmatpush1.msra.mxu0 0.0
    %700 = vmatprep.subr.mxu0 0.0
    %701 = vmatpush1.msra.mxu0 0.0
    %702 = vmatprep.subr.mxu0 0.0
    %703 = vmatpush1.msra.mxu0 0.0
    %704 = vmatprep.subr.mxu0 0.0
    %705 = vmatpush1.msra.mxu0 0.0
    %706 = vmatprep.subr.mxu0 0.0
    %707 = vmatpush1.msra.mxu0 0.0
    %708 = vmatprep.subr.mxu0 0.0
    %709 = vmatpush1.msra.mxu0 0.0
    %710 = vmatprep.subr.mxu0 0.0
    %711 = vmatpush1.msra.mxu0 0.0
    %712 = vmatprep.subr.mxu0 0.0
    %713 = vmatpush1.msra.mxu0 0.0
    %714 = vmatprep.subr.mxu0 0.0
    %715 = vmatpush1.msra.mxu0 0.0
    %716 = vmatprep.subr.mxu0 0.0
    %717 = vmatpush1.msra.mxu0 0.0
    %718 = vmatprep.subr.mxu0 0.0
    %719 = vmatpush1.msra.mxu0 0.0
    %720 = vmatprep.subr.mxu0 0.0
    %721 = vmatpush1.msra.mxu0 0.0
    %722 = vmatprep.subr.mxu0 0.0
    %723 = vmatpush1.msra.mxu0 0.0
    %724 = vmatprep.subr.mxu0 0.0
    %725 = vmatpush1.msra.mxu0 0.0
    %726 = vmatprep.subr.mxu0 0.0
    %727 = vmatpush1.msra.mxu0 0.0
    %728 = vmatprep.subr.mxu0 0.0
    %729 = vmatpush1.msra.mxu0 0.0
    %730 = vmatprep.subr.mxu0 0.0
    %731 = vmatpush1.msra.mxu0 0.0
    %732 = vmatprep.subr.mxu0 0.0
    %733 = vmatpush1.msra.mxu0 0.0
    %734 = vmatprep.subr.mxu0 0.0
    %735 = vmatpush1.msra.mxu0 0.0
    %736 = vmatprep.subr.mxu0 0.0
    %737 = vmatpush1.msra.mxu0 0.0
    %738 = vmatprep.subr.mxu0 0.0
    %739 = vmatpush1.msra.mxu0 0.0
    %740 = vmatprep.subr.mxu0 0.0
    %741 = vmatpush1.msra.mxu0 0.0
    %742 = vmatprep.subr.mxu0 0.0
    %743 = vmatpush1.msra.mxu0 0.0
    %744 = vmatprep.mubr.f32.mxu0 0.0
    %745 = vmatmul.mubr.f32.gmra.mrb[0].mxu0 %v678
    %v746 = vpop.f32.mrb[0].mxu0
    %v747 = vadd.f32 0.0, %v746
    %v748 = vpop.f32.mrb[0].mxu0
    %v749 = vadd.f32 0.0, %v748
    %750 = vdwg.mxu0
    %v751 = vadd.f32 %v673, %v747
    %v752 = vadd.f32 %v674, %v749
    %v753 = vxor.u32 %v751, 2147483648
    %v754 = vmul.f32 %v753, 1.442695
    %v755 = vpow.pop %v754
    %v756 = vadd.f32 %v755, 1.0
    %v757 = vrcp.pop %v756
    %v758 = vmul.f32 1.0, %v757
    %v759 = vtanh.pop %v752
    %v760 = vxor.u32 %v752, 2147483648
    %v761 = vmul.f32 %v760, 1.442695
    %v762 = vpow.pop %v761
    %v763 = vadd.f32 %v762, 1.0
    %v764 = vrcp.pop %v763
    %v765 = vmul.f32 1.0, %v764
    %v767 = vrot.slane %v658, 6
    %v769 = vmul.f32 %v758, %v767
    %v770 = vmul.f32 %v758, %v759
    %772 = vrot.lane.b32.xlu0 %v770, 64
    %v773 = vpop.permute.xlu0 %772
    %v775 = vadd.f32 %v769, %v773
    %v776 = vtanh.pop %v775
    %v777 = vmul.f32 %v765, %v776
    %779 = vrot.lane.b32.xlu0 %v777, 64
    %v780 = vpop.permute.xlu0 %779
    %s782 = scalar_lea.vmem [#allocation9], 8
    %783 = vst.msk [vmem:[%s782] sm:$0x3] %vm300, %v780
    %784 = vrot.lane.b32.xlu0 %v777, 32
    %v785 = vpop.permute.xlu0 %784
    %s787 = scalar_lea.vmem [#allocation10], 6
    %788 = vst.msk [vmem:[%s787] sm:$0x3] %vm300, %v785
    %v789 = vld [vmem:[#allocation2 + $0x10] sm:$0xc]
    %v790 = vld [vmem:[#allocation2 + $0x18] sm:$0xc]
    %v791 = vsel %vm92, %v780, 0
    %793 = vmatprep.subr.mxu0 %v181
    %794 = vmatpush1.msra.mxu0 %v180
    %795 = vmatprep.subr.mxu0 %v183
    %796 = vmatpush1.msra.mxu0 %v182
    %797 = vmatprep.subr.mxu0 %v185
    %798 = vmatpush1.msra.mxu0 %v184
    %799 = vmatprep.subr.mxu0 %v187
    %800 = vmatpush1.msra.mxu0 %v186
    %801 = vmatprep.subr.mxu0 %v189
    %802 = vmatpush1.msra.mxu0 %v188
    %803 = vmatprep.subr.mxu0 %v191
    %804 = vmatpush1.msra.mxu0 %v190
    %805 = vmatprep.subr.mxu0 %v193
    %806 = vmatpush1.msra.mxu0 %v192
    %807 = vmatprep.subr.mxu0 %v195
    %808 = vmatpush1.msra.mxu0 %v194
    %809 = vmatprep.subr.mxu0 0.0
    %810 = vmatpush1.msra.mxu0 0.0
    %811 = vmatprep.subr.mxu0 0.0
    %812 = vmatpush1.msra.mxu0 0.0
    %813 = vmatprep.subr.mxu0 0.0
    %814 = vmatpush1.msra.mxu0 0.0
    %815 = vmatprep.subr.mxu0 0.0
    %816 = vmatpush1.msra.mxu0 0.0
    %817 = vmatprep.subr.mxu0 0.0
    %818 = vmatpush1.msra.mxu0 0.0
    %819 = vmatprep.subr.mxu0 0.0
    %820 = vmatpush1.msra.mxu0 0.0
    %821 = vmatprep.subr.mxu0 0.0
    %822 = vmatpush1.msra.mxu0 0.0
    %823 = vmatprep.subr.mxu0 0.0
    %824 = vmatpush1.msra.mxu0 0.0
    %825 = vmatprep.subr.mxu0 0.0
    %826 = vmatpush1.msra.mxu0 0.0
    %827 = vmatprep.subr.mxu0 0.0
    %828 = vmatpush1.msra.mxu0 0.0
    %829 = vmatprep.subr.mxu0 0.0
    %830 = vmatpush1.msra.mxu0 0.0
    %831 = vmatprep.subr.mxu0 0.0
    %832 = vmatpush1.msra.mxu0 0.0
    %833 = vmatprep.subr.mxu0 0.0
    %834 = vmatpush1.msra.mxu0 0.0
    %835 = vmatprep.subr.mxu0 0.0
    %836 = vmatpush1.msra.mxu0 0.0
    %837 = vmatprep.subr.mxu0 0.0
    %838 = vmatpush1.msra.mxu0 0.0
    %839 = vmatprep.subr.mxu0 0.0
    %840 = vmatpush1.msra.mxu0 0.0
    %841 = vmatprep.subr.mxu0 0.0
    %842 = vmatpush1.msra.mxu0 0.0
    %843 = vmatprep.subr.mxu0 0.0
    %844 = vmatpush1.msra.mxu0 0.0
    %845 = vmatprep.subr.mxu0 0.0
    %846 = vmatpush1.msra.mxu0 0.0
    %847 = vmatprep.subr.mxu0 0.0
    %848 = vmatpush1.msra.mxu0 0.0
    %849 = vmatprep.subr.mxu0 0.0
    %850 = vmatpush1.msra.mxu0 0.0
    %851 = vmatprep.subr.mxu0 0.0
    %852 = vmatpush1.msra.mxu0 0.0
    %853 = vmatprep.subr.mxu0 0.0
    %854 = vmatpush1.msra.mxu0 0.0
    %855 = vmatprep.subr.mxu0 0.0
    %856 = vmatpush1.msra.mxu0 0.0
    %857 = vmatprep.mubr.f32.mxu0 0.0
    %858 = vmatmul.mubr.f32.gmra.mrb[0].mxu0 %v791
    %v859 = vpop.f32.mrb[0].mxu0
    %v860 = vadd.f32 0.0, %v859
    %v861 = vpop.f32.mrb[0].mxu0
    %v862 = vadd.f32 0.0, %v861
    %863 = vdwg.mxu0
    %v866 = vrot.slane %v860, 6
    %v867 = vrot.slane %v862, 6
    %v870 = vadd.f32 %v789, %v866
    %v871 = vadd.f32 %v790, %v867
    %v872 = vxor.u32 %v870, 2147483648
    %v873 = vmul.f32 %v872, 1.442695
    %v874 = vpow.pop %v873
    %v875 = vadd.f32 %v874, 1.0
    %v876 = vrcp.pop %v875
    %v877 = vmul.f32 1.0, %v876
    %v878 = vtanh.pop %v871
    %v879 = vxor.u32 %v871, 2147483648
    %v880 = vmul.f32 %v879, 1.442695
    %v881 = vpow.pop %v880
    %v882 = vadd.f32 %v881, 1.0
    %v883 = vrcp.pop %v882
    %v884 = vmul.f32 1.0, %v883
    %v886 = vrot.slane %v775, 6
    %v888 = vmul.f32 %v877, %v886
    %v889 = vmul.f32 %v877, %v878
    %891 = vrot.lane.b32.xlu0 %v889, 64
    %v892 = vpop.permute.xlu0 %891
    %v894 = vadd.f32 %v888, %v892
    %v895 = vtanh.pop %v894
    %v896 = vmul.f32 %v884, %v895
    %898 = vrot.lane.b32.xlu0 %v896, 64
    %v899 = vpop.permute.xlu0 %898
    %s901 = scalar_lea.vmem [#allocation9], 10
    %902 = vst.msk [vmem:[%s901 - $0x2] sm:$0xc] %vm420, %v899
    %903 = vrot.lane.b32.xlu0 %v896, 32
    %v904 = vpop.permute.xlu0 %903
    %s906 = scalar_lea.vmem [#allocation10], 4
    %907 = vst.msk [vmem:[%s906 - $0x2] sm:$0xc] %vm420, %v904
    %v908 = vld [vmem:[#allocation2 + $0x10] sm:$0x30]
    %v909 = vld [vmem:[#allocation2 + $0x18] sm:$0x30]
    %v910 = vrot.slane %v896, 2
    %911 = vrot.lane.b32.xlu0 %v910, 64
    %v912 = vpop.permute.xlu0 %911
    %v913 = vsel %vm92, %v912, 0
    %915 = vmatprep.subr.mxu0 %v181
    %916 = vmatpush1.msra.mxu0 %v180
    %917 = vmatprep.subr.mxu0 %v183
    %918 = vmatpush1.msra.mxu0 %v182
    %919 = vmatprep.subr.mxu0 %v185
    %920 = vmatpush1.msra.mxu0 %v184
    %921 = vmatprep.subr.mxu0 %v187
    %922 = vmatpush1.msra.mxu0 %v186
    %923 = vmatprep.subr.mxu0 %v189
    %924 = vmatpush1.msra.mxu0 %v188
    %925 = vmatprep.subr.mxu0 %v191
    %926 = vmatpush1.msra.mxu0 %v190
    %927 = vmatprep.subr.mxu0 %v193
    %928 = vmatpush1.msra.mxu0 %v192
    %929 = vmatprep.subr.mxu0 %v195
    %930 = vmatpush1.msra.mxu0 %v194
    %931 = vmatprep.subr.mxu0 0.0
    %932 = vmatpush1.msra.mxu0 0.0
    %933 = vmatprep.subr.mxu0 0.0
    %934 = vmatpush1.msra.mxu0 0.0
    %935 = vmatprep.subr.mxu0 0.0
    %936 = vmatpush1.msra.mxu0 0.0
    %937 = vmatprep.subr.mxu0 0.0
    %938 = vmatpush1.msra.mxu0 0.0
    %939 = vmatprep.subr.mxu0 0.0
    %940 = vmatpush1.msra.mxu0 0.0
    %941 = vmatprep.subr.mxu0 0.0
    %942 = vmatpush1.msra.mxu0 0.0
    %943 = vmatprep.subr.mxu0 0.0
    %944 = vmatpush1.msra.mxu0 0.0
    %945 = vmatprep.subr.mxu0 0.0
    %946 = vmatpush1.msra.mxu0 0.0
    %947 = vmatprep.subr.mxu0 0.0
    %948 = vmatpush1.msra.mxu0 0.0
    %949 = vmatprep.subr.mxu0 0.0
    %950 = vmatpush1.msra.mxu0 0.0
    %951 = vmatprep.subr.mxu0 0.0
    %952 = vmatpush1.msra.mxu0 0.0
    %953 = vmatprep.subr.mxu0 0.0
    %954 = vmatpush1.msra.mxu0 0.0
    %955 = vmatprep.subr.mxu0 0.0
    %956 = vmatpush1.msra.mxu0 0.0
    %957 = vmatprep.subr.mxu0 0.0
    %958 = vmatpush1.msra.mxu0 0.0
    %959 = vmatprep.subr.mxu0 0.0
    %960 = vmatpush1.msra.mxu0 0.0
    %961 = vmatprep.subr.mxu0 0.0
    %962 = vmatpush1.msra.mxu0 0.0
    %963 = vmatprep.subr.mxu0 0.0
    %964 = vmatpush1.msra.mxu0 0.0
    %965 = vmatprep.subr.mxu0 0.0
    %966 = vmatpush1.msra.mxu0 0.0
    %967 = vmatprep.subr.mxu0 0.0
    %968 = vmatpush1.msra.mxu0 0.0
    %969 = vmatprep.subr.mxu0 0.0
    %970 = vmatpush1.msra.mxu0 0.0
    %971 = vmatprep.subr.mxu0 0.0
    %972 = vmatpush1.msra.mxu0 0.0
    %973 = vmatprep.subr.mxu0 0.0
    %974 = vmatpush1.msra.mxu0 0.0
    %975 = vmatprep.subr.mxu0 0.0
    %976 = vmatpush1.msra.mxu0 0.0
    %977 = vmatprep.subr.mxu0 0.0
    %978 = vmatpush1.msra.mxu0 0.0
    %979 = vmatprep.mubr.f32.mxu0 0.0
    %980 = vmatmul.mubr.f32.gmra.mrb[0].mxu0 %v913
    %v981 = vpop.f32.mrb[0].mxu0
    %v982 = vadd.f32 0.0, %v981
    %v983 = vpop.f32.mrb[0].mxu0
    %v984 = vadd.f32 0.0, %v983
    %985 = vdwg.mxu0
    %v988 = vrot.slane %v982, 4
    %v989 = vrot.slane %v984, 4
    %v992 = vadd.f32 %v908, %v988
    %v993 = vadd.f32 %v909, %v989
    %v994 = vxor.u32 %v992, 2147483648
    %v995 = vmul.f32 %v994, 1.442695
    %v996 = vpow.pop %v995
    %v997 = vadd.f32 %v996, 1.0
    %v998 = vrcp.pop %v997
    %v999 = vmul.f32 1.0, %v998
    %v1000 = vtanh.pop %v993
    %v1001 = vxor.u32 %v993, 2147483648
    %v1002 = vmul.f32 %v1001, 1.442695
    %v1003 = vpow.pop %v1002
    %v1004 = vadd.f32 %v1003, 1.0
    %v1005 = vrcp.pop %v1004
    %v1006 = vmul.f32 1.0, %v1005
    %v1008 = vrot.slane %v894, 6
    %v1010 = vmul.f32 %v999, %v1008
    %v1011 = vmul.f32 %v999, %v1000
    %1013 = vrot.lane.b32.xlu0 %v1011, 64
    %v1014 = vpop.permute.xlu0 %1013
    %v1016 = vadd.f32 %v1010, %v1014
    %v1017 = vtanh.pop %v1016
    %v1018 = vmul.f32 %v1006, %v1017
    %1020 = vrot.lane.b32.xlu0 %v1018, 64
    %v1021 = vpop.permute.xlu0 %1020
    %s1023 = scalar_lea.vmem [#allocation9], 12
    %1024 = vst.msk [vmem:[%s1023 - $0x4] sm:$0x30] %vm543, %v1021
    %1025 = vrot.lane.b32.xlu0 %v1018, 32
    %v1026 = vpop.permute.xlu0 %1025
    %s1028 = scalar_lea.vmem [#allocation10], 2
    %1029 = vst.msk [vmem:[%s1028 - $0x4] sm:$0x30] %vm543, %v1026
    %v1030 = vld [vmem:[#allocation2 + $0x10] sm:$0xc0]
    %v1031 = vld [vmem:[#allocation2 + $0x18] sm:$0xc0]
    %v1032 = vrot.slane %v1018, 4
    %1033 = vrot.lane.b32.xlu0 %v1032, 64
    %v1034 = vpop.permute.xlu0 %1033
    %v1035 = vsel %vm92, %v1034, 0
    %1037 = vmatprep.subr.mxu0 %v181
    %1038 = vmatpush1.msra.mxu0 %v180
    %1039 = vmatprep.subr.mxu0 %v183
    %1040 = vmatpush1.msra.mxu0 %v182
    %1041 = vmatprep.subr.mxu0 %v185
    %1042 = vmatpush1.msra.mxu0 %v184
    %1043 = vmatprep.subr.mxu0 %v187
    %1044 = vmatpush1.msra.mxu0 %v186
    %1045 = vmatprep.subr.mxu0 %v189
    %1046 = vmatpush1.msra.mxu0 %v188
    %1047 = vmatprep.subr.mxu0 %v191
    %1048 = vmatpush1.msra.mxu0 %v190
    %1049 = vmatprep.subr.mxu0 %v193
    %1050 = vmatpush1.msra.mxu0 %v192
    %1051 = vmatprep.subr.mxu0 %v195
    %1052 = vmatpush1.msra.mxu0 %v194
    %1053 = vmatprep.subr.mxu0 0.0
    %1054 = vmatpush1.msra.mxu0 0.0
    %1055 = vmatprep.subr.mxu0 0.0
    %1056 = vmatpush1.msra.mxu0 0.0
    %1057 = vmatprep.subr.mxu0 0.0
    %1058 = vmatpush1.msra.mxu0 0.0
    %1059 = vmatprep.subr.mxu0 0.0
    %1060 = vmatpush1.msra.mxu0 0.0
    %1061 = vmatprep.subr.mxu0 0.0
    %1062 = vmatpush1.msra.mxu0 0.0
    %1063 = vmatprep.subr.mxu0 0.0
    %1064 = vmatpush1.msra.mxu0 0.0
    %1065 = vmatprep.subr.mxu0 0.0
    %1066 = vmatpush1.msra.mxu0 0.0
    %1067 = vmatprep.subr.mxu0 0.0
    %1068 = vmatpush1.msra.mxu0 0.0
    %1069 = vmatprep.subr.mxu0 0.0
    %1070 = vmatpush1.msra.mxu0 0.0
    %1071 = vmatprep.subr.mxu0 0.0
    %1072 = vmatpush1.msra.mxu0 0.0
    %1073 = vmatprep.subr.mxu0 0.0
    %1074 = vmatpush1.msra.mxu0 0.0
    %1075 = vmatprep.subr.mxu0 0.0
    %1076 = vmatpush1.msra.mxu0 0.0
    %1077 = vmatprep.subr.mxu0 0.0
    %1078 = vmatpush1.msra.mxu0 0.0
    %1079 = vmatprep.subr.mxu0 0.0
    %1080 = vmatpush1.msra.mxu0 0.0
    %1081 = vmatprep.subr.mxu0 0.0
    %1082 = vmatpush1.msra.mxu0 0.0
    %1083 = vmatprep.subr.mxu0 0.0
    %1084 = vmatpush1.msra.mxu0 0.0
    %1085 = vmatprep.subr.mxu0 0.0
    %1086 = vmatpush1.msra.mxu0 0.0
    %1087 = vmatprep.subr.mxu0 0.0
    %1088 = vmatpush1.msra.mxu0 0.0
    %1089 = vmatprep.subr.mxu0 0.0
    %1090 = vmatpush1.msra.mxu0 0.0
    %1091 = vmatprep.subr.mxu0 0.0
    %1092 = vmatpush1.msra.mxu0 0.0
    %1093 = vmatprep.subr.mxu0 0.0
    %1094 = vmatpush1.msra.mxu0 0.0
    %1095 = vmatprep.subr.mxu0 0.0
    %1096 = vmatpush1.msra.mxu0 0.0
    %1097 = vmatprep.subr.mxu0 0.0
    %1098 = vmatpush1.msra.mxu0 0.0
    %1099 = vmatprep.subr.mxu0 0.0
    %1100 = vmatpush1.msra.mxu0 0.0
    %1101 = vmatprep.mubr.f32.mxu0 0.0
    %1102 = vmatmul.mubr.f32.gmra.mrb[0].mxu0 %v1035
    %v1103 = vpop.f32.mrb[0].mxu0
    %v1104 = vadd.f32 0.0, %v1103
    %v1105 = vpop.f32.mrb[0].mxu0
    %v1106 = vadd.f32 0.0, %v1105
    %1107 = vdwg.mxu0
    %v1110 = vrot.slane %v1104, 2
    %v1111 = vrot.slane %v1106, 2
    %v1114 = vadd.f32 %v1030, %v1110
    %v1115 = vadd.f32 %v1031, %v1111
    %v1116 = vxor.u32 %v1114, 2147483648
    %v1117 = vmul.f32 %v1116, 1.442695
    %v1118 = vpow.pop %v1117
    %v1119 = vadd.f32 %v1118, 1.0
    %v1120 = vrcp.pop %v1119
    %v1121 = vmul.f32 1.0, %v1120
    %v1122 = vtanh.pop %v1115
    %v1123 = vxor.u32 %v1115, 2147483648
    %v1124 = vmul.f32 %v1123, 1.442695
    %v1125 = vpow.pop %v1124
    %v1126 = vadd.f32 %v1125, 1.0
    %v1127 = vrcp.pop %v1126
    %v1128 = vmul.f32 1.0, %v1127
    %v1130 = vrot.slane %v1016, 6
    %v1132 = vmul.f32 %v1121, %v1130
    %v1133 = vmul.f32 %v1121, %v1122
    %1135 = vrot.lane.b32.xlu0 %v1133, 64
    %v1136 = vpop.permute.xlu0 %1135
    %v1138 = vadd.f32 %v1132, %v1136
    %v1139 = vtanh.pop %v1138
    %v1140 = vmul.f32 %v1128, %v1139
    %1142 = vrot.lane.b32.xlu0 %v1140, 64
    %v1143 = vpop.permute.xlu0 %1142
    %s1145 = scalar_lea.vmem [#allocation9], 14
    %1146 = vst.msk [vmem:[%s1145 - $0x6] sm:$0xc0] %vm666, %v1143
    %1147 = vrot.lane.b32.xlu0 %v1140, 32
    %v1148 = vpop.permute.xlu0 %1147
    %1150 = vst.msk [vmem:[#allocation10 - $0x6] sm:$0xc0] %vm666, %v1148
    // Predicated region
    $region30: #{tpu_custom_call.1} parent=1 // pred_check
      _
    $region31: #{tpu_custom_call.1} parent=1 // pred_check_branch
      %1152 = sbr.rel (0) target = $region33
    $region32: #{tpu_custom_call.1} parent=1 // pred_region
      %s1154 = ssub.s32 256, 256
      %1155 = vsyncadd [#allocation5], %s1154
      %s1156 = sshll.u32 [#allocation9], 4
      %s1157 = int_to_ptr.vmem [resolvable:$true] %s1156
      %1162 = dma.vmem_to_hbm [thread:$0]  %s1157, 256, %s4, [#allocation5], 32, 32, 2
    $region33: #{tpu_custom_call.1} parent=1 // pred_fallthru
      _
    // Predicated region
    $region34: #{tpu_custom_call.1} parent=1 // pred_check
      _
    $region35: #{tpu_custom_call.1} parent=1 // pred_check_branch
      %1164 = sbr.rel (0) target = $region37
    $region36: #{tpu_custom_call.1} parent=1 // pred_region
      %s1166 = ssub.s32 256, 256
      %1167 = vsyncadd [#allocation11], %s1166
      %s1168 = sshll.u32 [#allocation10], 4
      %s1169 = int_to_ptr.vmem [resolvable:$true] %s1168
      %1174 = dma.vmem_to_hbm [thread:$0]  %s1169, 256, %s5, [#allocation11], 32, 32, 2
    $region37: #{tpu_custom_call.1} parent=1 // pred_fallthru
      _
    // Predicated region
    $region38: #{tpu_custom_call.1} parent=1 // pred_check
      _
    $region39: #{tpu_custom_call.1} parent=1 // pred_check_branch
      %1176 = sbr.rel (0) target = $region41
    $region40: #{tpu_custom_call.1} parent=1 // pred_region
      %1177 = dma.done [#allocation5], 256
    $region41: #{tpu_custom_call.1} parent=1 // pred_fallthru
      _
    // Predicated region
    $region42: #{tpu_custom_call.1} parent=1 // pred_check
      _
    $region43: #{tpu_custom_call.1} parent=1 // pred_check_branch
      %1179 = sbr.rel (0) target = $region45
    $region44: #{tpu_custom_call.1} parent=1 // pred_region
      %1180 = dma.done [#allocation11], 256
    $region45: #{tpu_custom_call.1} parent=1 // pred_fallthru
      _
    %1181 = vsyncpa [#allocation4], 1
    %1182 = vsyncpa [#allocation7], 1
    %1183 = vsyncpa [#allocation5], 1
    %1184 = vsyncpa [#allocation11], 1

</llo_original>
